<compile_context>
chip_gen: v7x
topology: tpu7x:2x2x1
jax: 0.10.0
libtpu: 0.0.40
codegen_flags: <defaults>
</compile_context>

<pallas_src>
import functools

import jax
import jax.numpy as jnp
from jax.experimental import pallas as pl
from jax.experimental.pallas import tpu as pltpu


# ---------------------------------------------------------------------------
# Kernels
# ---------------------------------------------------------------------------

def encoder_stage1_kernel(xw1_ref, adj_ref, wcat_ref, sup_ref):
    """support[row_tile] = relu(adj[row_tile, :] @ xw1) @ W_cat.

    xw1 = x @ W1 is precomputed in the wrapper, so every (b, r) grid point is
    independent and both grid axes are "parallel".
    """
    h1 = jnp.maximum(
        jnp.dot(adj_ref[0], xw1_ref[0], preferred_element_type=jnp.float32),
        0.0)                                                       # [TM, H1] f32
    sup = jnp.dot(h1.astype(wcat_ref.dtype), wcat_ref[...],
                  preferred_element_type=jnp.float32)              # [TM, C2P]
    sup_ref[0] = sup.astype(sup_ref.dtype)


def encoder_stage2_kernel(adj_ref, sup_ref, mulv_ref, z_ref, zt_ref, *, h2):
    """[mu | logvar][row_tile] = adj[row_tile, :] @ support (fused gc2/gc3).

    Also emits bf16 z (= mu) and z.T tiles directly for the decoder, so the
    wrapper does no extra cast/transpose pass over the mu tensor.
    """
    res = jnp.dot(adj_ref[0], sup_ref[0],
                  preferred_element_type=jnp.float32)              # [TM, C2P] f32
    mulv_ref[0] = res
    z_ref[0] = res[:, :h2].astype(z_ref.dtype)                     # [TM, H2] bf16
    zt_ref[0] = res.T[:h2, :].astype(zt_ref.dtype)                 # [H2, TM] bf16


def decoder_kernel(z_ref, zt_ref, rec_ref):
    """rec[i_tile, j_tile] = z[i_tile] @ z.T[:, j_tile]; bf16 writeback."""
    rec_ref[0] = jnp.dot(z_ref[0], zt_ref[0],
                         preferred_element_type=jnp.float32).astype(rec_ref.dtype)


# ---------------------------------------------------------------------------
# Wrapper
# ---------------------------------------------------------------------------

def _round_up(v, m):
    return ((v + m - 1) // m) * m


def _pad_axis(a, axis, target):
    pad = target - a.shape[axis]
    if pad <= 0:
        return a
    widths = [(0, 0)] * a.ndim
    widths[axis] = (0, pad)
    return jnp.pad(a, widths)


def _vmem_limit(single_buffer_bytes):
    """Scoped-VMEM limit: 2x (double-buffering) + headroom, clamped to a value
    that is safe on v5e/v6e (128 MiB physical) and v7x (64 MiB physical)."""
    return int(min(max(2 * single_buffer_bytes + (8 << 20), 16 << 20), 48 << 20))


def gcn_model_vae_forward(x, adj, w1, w_mu, w_lv, *, enc_row_tile=128, dec_tile=256):
    """x: [B, N, F], adj: [B, N, N]; returns (recovered_adj, mu, logvar).

    recovered_adj is bf16 (decoder is HBM-writeback bound); mu/logvar are f32.
    """
    B, N, F = x.shape
    H1 = w1.shape[1]
    H2 = w_mu.shape[1]
    C2 = 2 * H2
    C2P = _round_up(C2, 128)          # lane-dense fused gc2/gc3 output width

    TM = enc_row_tile                 # encoder row tile
    TD = dec_tile                     # decoder output tile (decoupled, larger)
    Np = _round_up(N, max(TM, TD))    # node padding serves both tilings
    R = Np // TM
    RD = Np // TD

    cdt = jnp.bfloat16                # MXU input dtype (f32 accumulation inside)

    # Fused, lane-padded gc2/gc3 weight: [W_mu | W_lv | 0].
    wcat = _pad_axis(jnp.concatenate([w_mu, w_lv], axis=1), 1, C2P).astype(cdt)

    # Zero padding of nodes is exact: padded adj rows/cols and x rows are zero,
    # so padded rows of every intermediate / output are zero and are sliced off.
    xp = _pad_axis(x, 1, Np).astype(cdt)                          # [B, Np, F]
    adjp = _pad_axis(_pad_axis(adj, 1, Np), 2, Np).astype(cdt)    # [B, Np, Np]
    w1b = w1.astype(cdt)

    # x @ W1 hoisted out of the kernel: one batched XLA matmul, reused by every
    # row tile of stage 1 (index_map (b, 0, 0) keeps it resident per graph).
    xw1 = jnp.einsum('bnf,fh->bnh', xp, w1b,
                     preferred_element_type=jnp.float32).astype(cdt)  # [B, Np, H1]

    # ------------- Encoder stage 1: support = relu(adj @ xW1) @ Wcat ----------
    s1_buf = (Np * H1 + TM * Np + H1 * C2P + TM * C2P) * 2        # bf16 bytes
    support = pl.pallas_call(
        encoder_stage1_kernel,
        out_shape=jax.ShapeDtypeStruct((B, Np, C2P), cdt),
        grid_spec=pltpu.PrefetchScalarGridSpec(
            num_scalar_prefetch=0,
            grid=(B, R),
            in_specs=[
                pl.BlockSpec((1, Np, H1), lambda b, r: (b, 0, 0)),   # x@W1, resident
                pl.BlockSpec((1, TM, Np), lambda b, r: (b, r, 0)),   # adj row strip
                pl.BlockSpec((H1, C2P), lambda b, r: (0, 0)),        # fused weights
            ],
            out_specs=pl.BlockSpec((1, TM, C2P), lambda b, r: (b, r, 0)),
        ),
        compiler_params=pltpu.CompilerParams(
            dimension_semantics=("parallel", "parallel"),
            vmem_limit_bytes=_vmem_limit(s1_buf)),
        cost_estimate=pl.CostEstimate(
            flops=int(2 * B * (Np * Np * H1 + Np * H1 * C2P)),
            transcendentals=0,
            bytes_accessed=int(adjp.size * 2 + xw1.size * 2
                               + wcat.size * 2 + B * Np * C2P * 2)),
    )(xw1, adjp, wcat)

    # ------------- Encoder stage 2: [mu | logvar] = adj @ support -------------
    s2_buf = (TM * Np * 2 + Np * C2P * 2 + TM * C2P * 4
              + TM * H2 * 2 + H2 * TM * 2)
    mulv, z, zt = pl.pallas_call(
        functools.partial(encoder_stage2_kernel, h2=H2),
        out_shape=(jax.ShapeDtypeStruct((B, Np, C2P), jnp.float32),   # [mu|logvar]
                   jax.ShapeDtypeStruct((B, Np, H2), cdt),            # z  (= mu)
                   jax.ShapeDtypeStruct((B, H2, Np), cdt)),           # z.T
        grid_spec=pltpu.PrefetchScalarGridSpec(
            num_scalar_prefetch=0,
            grid=(B, R),
            in_specs=[
                pl.BlockSpec((1, TM, Np), lambda b, r: (b, r, 0)),   # adj row strip
                pl.BlockSpec((1, Np, C2P), lambda b, r: (b, 0, 0)),  # full support
            ],
            out_specs=[
                pl.BlockSpec((1, TM, C2P), lambda b, r: (b, r, 0)),
                pl.BlockSpec((1, TM, H2), lambda b, r: (b, r, 0)),
                pl.BlockSpec((1, H2, TM), lambda b, r: (b, 0, r)),
            ],
        ),
        compiler_params=pltpu.CompilerParams(
            dimension_semantics=("parallel", "parallel"),
            vmem_limit_bytes=_vmem_limit(s2_buf)),
        cost_estimate=pl.CostEstimate(
            flops=int(2 * B * Np * Np * C2P),
            transcendentals=0,
            bytes_accessed=int(adjp.size * 2 + B * Np * C2P * 2
                               + B * Np * C2P * 4 + 2 * B * Np * H2 * 2)),
    )(adjp, support)

    mu = mulv[:, :N, :H2]
    logvar = mulv[:, :N, H2:C2]

    # ------------- Decoder: rec = z @ z.T  (eval mode: z = mu) ---------------
    dec_buf = (TD * H2 * 2 + H2 * TD * 2 + TD * TD * 2)
    rec = pl.pallas_call(
        decoder_kernel,
        out_shape=jax.ShapeDtypeStruct((B, Np, Np), cdt),           # bf16 writeback
        grid_spec=pltpu.PrefetchScalarGridSpec(
            num_scalar_prefetch=0,
            grid=(B, RD, RD),
            in_specs=[
                pl.BlockSpec((1, TD, H2), lambda b, i, j: (b, i, 0)),
                pl.BlockSpec((1, H2, TD), lambda b, i, j: (b, 0, j)),
            ],
            out_specs=pl.BlockSpec((1, TD, TD), lambda b, i, j: (b, i, j)),
        ),
        compiler_params=pltpu.CompilerParams(
            dimension_semantics=("parallel", "parallel", "parallel"),
            vmem_limit_bytes=_vmem_limit(dec_buf)),
        cost_estimate=pl.CostEstimate(
            flops=int(2 * B * Np * Np * H2),
            transcendentals=0,
            bytes_accessed=int(z.size * 2 + zt.size * 2 + B * Np * Np * 2)),
    )(z, zt)

    return rec[:, :N, :N], mu, logvar


# ---------------------------------------------------------------------------
# Pure-JAX reference (f32) and self-test
# ---------------------------------------------------------------------------

def _reference(x, adj, w1, w_mu, w_lv):
    h1 = jnp.maximum(jnp.einsum('bij,bjf,fh->bih', adj, x, w1), 0.0)
    mu = jnp.einsum('bij,bjh,hk->bik', adj, h1, w_mu)
    lv = jnp.einsum('bij,bjh,hk->bik', adj, h1, w_lv)
    rec = jnp.einsum('bik,bjk->bij', mu, mu)
    return rec, mu, lv


if __name__ == "__main__":
    # Small-but-tiled shapes: B=2 graphs, N=256 nodes (one 256 decoder tile,
    # two 128-row encoder tiles), input_feat_dim=64, hidden1=64, hidden2=32.
    B, N, F, H1, H2 = 2, 256, 64, 64, 32

    key = jax.random.PRNGKey(0)
    kx, ka, k1, k2, k3 = jax.random.split(key, 5)

    x = jax.random.normal(kx, (B, N, F), dtype=jnp.float32)

    # Symmetric row-normalized adjacency with self-loops (typical VGAE preprocessing).
    a = (jax.random.uniform(ka, (B, N, N)) > 0.7).astype(jnp.float32)
    a = jnp.maximum(a, jnp.transpose(a, (0, 2, 1)))
    a = a + jnp.eye(N, dtype=jnp.float32)[None]
    adj = a / jnp.sum(a, axis=-1, keepdims=True)

    # Deterministic parameter init (Glorot-style scaling).
    w1 = jax.random.normal(k1, (F, H1), dtype=jnp.float32) * (1.0 / jnp.sqrt(F))
    w_mu = jax.random.normal(k2, (H1, H2), dtype=jnp.float32) * (1.0 / jnp.sqrt(H1))
    w_lv = jax.random.normal(k3, (H1, H2), dtype=jnp.float32) * (1.0 / jnp.sqrt(H1))

    forward = jax.jit(gcn_model_vae_forward)
    rec, mu, lv = forward(x, adj, w1, w_mu, w_lv)
    jax.block_until_ready((rec, mu, lv))

    rec_r, mu_r, lv_r = _reference(x, adj, w1, w_mu, w_lv)

    # bf16 MXU inputs / bf16 rec writeback with f32 accumulation -> loose tolerance.
    tol = dict(atol=3e-2, rtol=3e-2)
    assert jnp.allclose(rec.astype(jnp.float32), rec_r, **tol), "rec mismatch"
    assert jnp.allclose(mu, mu_r, **tol), "mu mismatch"
    assert jnp.allclose(lv, lv_r, **tol), "logvar mismatch"

    print("KERNEL_OK")
</pallas_src>

<mosaic_0001>
module attributes {stable_mosaic.version = 11 : i64} {
  func.func @encoder_stage1_kernel(%arg0: i32, %arg1: i32, %arg2: memref<1x256x64xbf16, #tpu.memory_space<vmem>>, %arg3: memref<1x128x256xbf16, #tpu.memory_space<vmem>>, %arg4: memref<64x128xbf16, #tpu.memory_space<vmem>>, %arg5: memref<1x128x128xbf16, #tpu.memory_space<vmem>>) attributes {dimension_semantics = [#tpu.dimension_semantics<parallel>, #tpu.dimension_semantics<parallel>], iteration_bounds = array<i64: 2, 2>, scalar_prefetch = 0 : i64, scratch_operands = 0 : i64, tpu.core_type = #tpu.core_type<tc>, window_params = [{transform_indices = @transform_0, window_bounds = array<i64: 1, 256, 64>}, {transform_indices = @transform_1, window_bounds = array<i64: 1, 128, 256>}, {pipeline_mode = #tpu.pipeline_mode<synchronous>, transform_indices = @transform_2, window_bounds = array<i64: 64, 128>}, {transform_indices = @transform_3, window_bounds = array<i64: 1, 128, 128>}]} {
    %c0 = arith.constant 0 : index
    %c0_0 = arith.constant 0 : index
    %c0_1 = arith.constant 0 : index
    %0 = vector.load %arg3[%c0, %c0_0, %c0_1] : memref<1x128x256xbf16, #tpu.memory_space<vmem>>, vector<1x128x256xbf16>
    %1 = vector.shape_cast %0 : vector<1x128x256xbf16> to vector<128x256xbf16>
    %c0_2 = arith.constant 0 : index
    %c0_3 = arith.constant 0 : index
    %c0_4 = arith.constant 0 : index
    %2 = vector.load %arg2[%c0_2, %c0_3, %c0_4] : memref<1x256x64xbf16, #tpu.memory_space<vmem>>, vector<1x256x64xbf16>
    %3 = vector.shape_cast %2 : vector<1x256x64xbf16> to vector<256x64xbf16>
    %cst = arith.constant dense<0.000000e+00> : vector<128x64xf32>
    %4 = tpu.matmul %1, %3, %cst {dimension_numbers = #tpu.dot_dimension_numbers<[1], [0], [0], [1], [0, 0, 1, 1], [], []>} : vector<128x256xbf16>, vector<256x64xbf16>, vector<128x64xf32> -> vector<128x64xf32>
    %cst_5 = arith.constant 0.000000e+00 : f32
    %5 = vector.broadcast %cst_5 : f32 to vector<128x64xf32>
    %6 = arith.maximumf %4, %5 : vector<128x64xf32>
    %7 = arith.truncf %6 : vector<128x64xf32> to vector<128x64xbf16>
    %c0_6 = arith.constant 0 : index
    %c0_7 = arith.constant 0 : index
    %8 = vector.load %arg4[%c0_6, %c0_7] : memref<64x128xbf16, #tpu.memory_space<vmem>>, vector<64x128xbf16>
    %cst_8 = arith.constant dense<0.000000e+00> : vector<128x128xf32>
    %9 = tpu.matmul %7, %8, %cst_8 {dimension_numbers = #tpu.dot_dimension_numbers<[1], [0], [0], [1], [0, 0, 1, 1], [], []>} : vector<128x64xbf16>, vector<64x128xbf16>, vector<128x128xf32> -> vector<128x128xf32>
    %10 = arith.truncf %9 : vector<128x128xf32> to vector<128x128xbf16>
    %c0_9 = arith.constant 0 : index
    %c0_10 = arith.constant 0 : index
    %c0_11 = arith.constant 0 : index
    %11 = vector.load %arg5[%c0_9, %c0_10, %c0_11] : memref<1x128x128xbf16, #tpu.memory_space<vmem>>, vector<1x128x128xbf16>
    %12 = vector.shape_cast %11 : vector<1x128x128xbf16> to vector<128x128xbf16>
    %13 = vector.shape_cast %10 : vector<128x128xbf16> to vector<1x128x128xbf16>
    tpu.vector_store %arg5[%c0_9, %c0_10, %c0_11], %13 {strides = array<i32>} : memref<1x128x128xbf16, #tpu.memory_space<vmem>>, vector<1x128x128xbf16>,
    return
  }
  func.func @transform_0(%arg0: i32, %arg1: i32) -> (i32, i32, i32) {
    %c0_i32 = arith.constant 0 : i32
    %c0_i32_0 = arith.constant 0 : i32
    %c0_i32_1 = arith.constant 0 : i32
    return %arg0, %c0_i32, %c0_i32_0 : i32, i32, i32
  }
  func.func @transform_1(%arg0: i32, %arg1: i32) -> (i32, i32, i32) {
    %c0_i32 = arith.constant 0 : i32
    %c0_i32_0 = arith.constant 0 : i32
    return %arg0, %arg1, %c0_i32 : i32, i32, i32
  }
  func.func @transform_2(%arg0: i32, %arg1: i32) -> (i32, i32) {
    %c0_i32 = arith.constant 0 : i32
    %c0_i32_0 = arith.constant 0 : i32
    %c0_i32_1 = arith.constant 0 : i32
    return %c0_i32, %c0_i32_0 : i32, i32
  }
  func.func @transform_3(%arg0: i32, %arg1: i32) -> (i32, i32, i32) {
    %c0_i32 = arith.constant 0 : i32
    %c0_i32_0 = arith.constant 0 : i32
    return %arg0, %arg1, %c0_i32 : i32, i32, i32
  }
}

module attributes {stable_mosaic.version = 11 : i64} {
  func.func @encoder_stage2_kernel(%arg0: i32, %arg1: i32, %arg2: memref<1x128x256xbf16, #tpu.memory_space<vmem>>, %arg3: memref<1x256x128xbf16, #tpu.memory_space<vmem>>, %arg4: memref<1x128x128xf32, #tpu.memory_space<vmem>>, %arg5: memref<1x128x32xbf16, #tpu.memory_space<vmem>>, %arg6: memref<1x32x128xbf16, #tpu.memory_space<vmem>>) attributes {dimension_semantics = [#tpu.dimension_semantics<parallel>, #tpu.dimension_semantics<parallel>], iteration_bounds = array<i64: 2, 2>, scalar_prefetch = 0 : i64, scratch_operands = 0 : i64, tpu.core_type = #tpu.core_type<tc>, window_params = [{transform_indices = @transform_0, window_bounds = array<i64: 1, 128, 256>}, {transform_indices = @transform_1, window_bounds = array<i64: 1, 256, 128>}, {transform_indices = @transform_2, window_bounds = array<i64: 1, 128, 128>}, {transform_indices = @transform_3, window_bounds = array<i64: 1, 128, 32>}, {transform_indices = @transform_4, window_bounds = array<i64: 1, 32, 128>}]} {
    %c0 = arith.constant 0 : index
    %c0_0 = arith.constant 0 : index
    %c0_1 = arith.constant 0 : index
    %0 = vector.load %arg2[%c0, %c0_0, %c0_1] : memref<1x128x256xbf16, #tpu.memory_space<vmem>>, vector<1x128x256xbf16>
    %1 = vector.shape_cast %0 : vector<1x128x256xbf16> to vector<128x256xbf16>
    %c0_2 = arith.constant 0 : index
    %c0_3 = arith.constant 0 : index
    %c0_4 = arith.constant 0 : index
    %2 = vector.load %arg3[%c0_2, %c0_3, %c0_4] : memref<1x256x128xbf16, #tpu.memory_space<vmem>>, vector<1x256x128xbf16>
    %3 = vector.shape_cast %2 : vector<1x256x128xbf16> to vector<256x128xbf16>
    %cst = arith.constant dense<0.000000e+00> : vector<128x128xf32>
    %4 = tpu.matmul %1, %3, %cst {dimension_numbers = #tpu.dot_dimension_numbers<[1], [0], [0], [1], [0, 0, 1, 1], [], []>} : vector<128x256xbf16>, vector<256x128xbf16>, vector<128x128xf32> -> vector<128x128xf32>
    %c0_5 = arith.constant 0 : index
    %c0_6 = arith.constant 0 : index
    %c0_7 = arith.constant 0 : index
    %5 = vector.load %arg4[%c0_5, %c0_6, %c0_7] : memref<1x128x128xf32, #tpu.memory_space<vmem>>, vector<1x128x128xf32>
    %6 = vector.shape_cast %5 : vector<1x128x128xf32> to vector<128x128xf32>
    %7 = vector.shape_cast %4 : vector<128x128xf32> to vector<1x128x128xf32>
    tpu.vector_store %arg4[%c0_5, %c0_6, %c0_7], %7 {strides = array<i32>} : memref<1x128x128xf32, #tpu.memory_space<vmem>>, vector<1x128x128xf32>,
    %8 = vector.extract_strided_slice %4 {offsets = [0, 0], sizes = [128, 32], strides = [1, 1]} : vector<128x128xf32> to vector<128x32xf32>
    %9 = arith.truncf %8 : vector<128x32xf32> to vector<128x32xbf16>
    %c0_8 = arith.constant 0 : index
    %c0_9 = arith.constant 0 : index
    %c0_10 = arith.constant 0 : index
    %10 = vector.load %arg5[%c0_8, %c0_9, %c0_10] : memref<1x128x32xbf16, #tpu.memory_space<vmem>>, vector<1x128x32xbf16>
    %11 = vector.shape_cast %10 : vector<1x128x32xbf16> to vector<128x32xbf16>
    %12 = vector.shape_cast %9 : vector<128x32xbf16> to vector<1x128x32xbf16>
    tpu.vector_store %arg5[%c0_8, %c0_9, %c0_10], %12 {strides = array<i32>} : memref<1x128x32xbf16, #tpu.memory_space<vmem>>, vector<1x128x32xbf16>,
    %13 = tpu.transpose %4, [1, 0] : vector<128x128xf32> -> vector<128x128xf32>
    %14 = vector.extract_strided_slice %13 {offsets = [0, 0], sizes = [32, 128], strides = [1, 1]} : vector<128x128xf32> to vector<32x128xf32>
    %15 = arith.truncf %14 : vector<32x128xf32> to vector<32x128xbf16>
    %c0_11 = arith.constant 0 : index
    %c0_12 = arith.constant 0 : index
    %c0_13 = arith.constant 0 : index
    %16 = vector.load %arg6[%c0_11, %c0_12, %c0_13] : memref<1x32x128xbf16, #tpu.memory_space<vmem>>, vector<1x32x128xbf16>
    %17 = vector.shape_cast %16 : vector<1x32x128xbf16> to vector<32x128xbf16>
    %18 = vector.shape_cast %15 : vector<32x128xbf16> to vector<1x32x128xbf16>
    tpu.vector_store %arg6[%c0_11, %c0_12, %c0_13], %18 {strides = array<i32>} : memref<1x32x128xbf16, #tpu.memory_space<vmem>>, vector<1x32x128xbf16>,
    return
  }
  func.func @transform_0(%arg0: i32, %arg1: i32) -> (i32, i32, i32) {
    %c0_i32 = arith.constant 0 : i32
    %c0_i32_0 = arith.constant 0 : i32
    return %arg0, %arg1, %c0_i32 : i32, i32, i32
  }
  func.func @transform_1(%arg0: i32, %arg1: i32) -> (i32, i32, i32) {
    %c0_i32 = arith.constant 0 : i32
    %c0_i32_0 = arith.constant 0 : i32
    %c0_i32_1 = arith.constant 0 : i32
    return %arg0, %c0_i32, %c0_i32_0 : i32, i32, i32
  }
  func.func @transform_2(%arg0: i32, %arg1: i32) -> (i32, i32, i32) {
    %c0_i32 = arith.constant 0 : i32
    %c0_i32_0 = arith.constant 0 : i32
    return %arg0, %arg1, %c0_i32 : i32, i32, i32
  }
  func.func @transform_3(%arg0: i32, %arg1: i32) -> (i32, i32, i32) {
    %c0_i32 = arith.constant 0 : i32
    %c0_i32_0 = arith.constant 0 : i32
    return %arg0, %arg1, %c0_i32 : i32, i32, i32
  }
  func.func @transform_4(%arg0: i32, %arg1: i32) -> (i32, i32, i32) {
    %c0_i32 = arith.constant 0 : i32
    %c0_i32_0 = arith.constant 0 : i32
    return %arg0, %c0_i32, %arg1 : i32, i32, i32
  }
}

module attributes {stable_mosaic.version = 11 : i64} {
  func.func @decoder_kernel(%arg0: i32, %arg1: i32, %arg2: i32, %arg3: memref<1x256x32xbf16, #tpu.memory_space<vmem>>, %arg4: memref<1x32x256xbf16, #tpu.memory_space<vmem>>, %arg5: memref<1x256x256xbf16, #tpu.memory_space<vmem>>) attributes {dimension_semantics = [#tpu.dimension_semantics<parallel>, #tpu.dimension_semantics<parallel>, #tpu.dimension_semantics<parallel>], iteration_bounds = array<i64: 2, 1, 1>, scalar_prefetch = 0 : i64, scratch_operands = 0 : i64, tpu.core_type = #tpu.core_type<tc>, window_params = [{transform_indices = @transform_0, window_bounds = array<i64: 1, 256, 32>}, {transform_indices = @transform_1, window_bounds = array<i64: 1, 32, 256>}, {transform_indices = @transform_2, window_bounds = array<i64: 1, 256, 256>}]} {
    %c0 = arith.constant 0 : index
    %c0_0 = arith.constant 0 : index
    %c0_1 = arith.constant 0 : index
    %0 = vector.load %arg3[%c0, %c0_0, %c0_1] : memref<1x256x32xbf16, #tpu.memory_space<vmem>>, vector<1x256x32xbf16>
    %1 = vector.shape_cast %0 : vector<1x256x32xbf16> to vector<256x32xbf16>
    %c0_2 = arith.constant 0 : index
    %c0_3 = arith.constant 0 : index
    %c0_4 = arith.constant 0 : index
    %2 = vector.load %arg4[%c0_2, %c0_3, %c0_4] : memref<1x32x256xbf16, #tpu.memory_space<vmem>>, vector<1x32x256xbf16>
    %3 = vector.shape_cast %2 : vector<1x32x256xbf16> to vector<32x256xbf16>
    %cst = arith.constant dense<0.000000e+00> : vector<256x256xf32>
    %4 = tpu.matmul %1, %3, %cst {dimension_numbers = #tpu.dot_dimension_numbers<[1], [0], [0], [1], [0, 0, 1, 1], [], []>} : vector<256x32xbf16>, vector<32x256xbf16>, vector<256x256xf32> -> vector<256x256xf32>
    %5 = arith.truncf %4 : vector<256x256xf32> to vector<256x256xbf16>
    %c0_5 = arith.constant 0 : index
    %c0_6 = arith.constant 0 : index
    %c0_7 = arith.constant 0 : index
    %6 = vector.load %arg5[%c0_5, %c0_6, %c0_7] : memref<1x256x256xbf16, #tpu.memory_space<vmem>>, vector<1x256x256xbf16>
    %7 = vector.shape_cast %6 : vector<1x256x256xbf16> to vector<256x256xbf16>
    %8 = vector.shape_cast %5 : vector<256x256xbf16> to vector<1x256x256xbf16>
    tpu.vector_store %arg5[%c0_5, %c0_6, %c0_7], %8 {strides = array<i32>} : memref<1x256x256xbf16, #tpu.memory_space<vmem>>, vector<1x256x256xbf16>,
    return
  }
  func.func @transform_0(%arg0: i32, %arg1: i32, %arg2: i32) -> (i32, i32, i32) {
    %c0_i32 = arith.constant 0 : i32
    %c0_i32_0 = arith.constant 0 : i32
    return %arg0, %arg1, %c0_i32 : i32, i32, i32
  }
  func.func @transform_1(%arg0: i32, %arg1: i32, %arg2: i32) -> (i32, i32, i32) {
    %c0_i32 = arith.constant 0 : i32
    %c0_i32_0 = arith.constant 0 : i32
    return %arg0, %c0_i32, %arg2 : i32, i32, i32
  }
  func.func @transform_2(%arg0: i32, %arg1: i32, %arg2: i32) -> (i32, i32, i32) {
    %c0_i32 = arith.constant 0 : i32
    return %arg0, %arg1, %arg2 : i32, i32, i32
  }
}

</mosaic_0001>

<llo_original>
// kernel: gcn_model_vae_forward.4
$region0: #{gcn_model_vae_forward.4}
  #allocation0 [shape = 'u32[]', space=smem, size = 0x4, offset = 0x4, fixed_abs, tag = 'smem constant byte address 0x4 - core index']
  #allocation1 [shape = 'u32[144,128]{1,0:T(1,128)}', space=vmem, size = 0x12000, scoped, tag = 'internal scratch']
  %s0 = inlined_call_operand.vmem [shape: bf16[2,256,256], index: 0, kind: input, shape index: {}]
  %s1 = inlined_call_operand.vmem [shape: bf16[2,256,128], index: 1, kind: input, shape index: {}]
  %s2 = inlined_call_operand.vmem [shape: f32[2,256,128], index: 2, kind: output, shape index: {0}]
  %s3 = inlined_call_operand.vmem [shape: bf16[2,256,32], index: 3, kind: output, shape index: {1}]
  %s4 = inlined_call_operand.vmem [shape: bf16[2,32,256], index: 4, kind: output, shape index: {2}]
  %5 = xla_tuple %s2, %s3, %s4
  %s6 = sld [smem:[#allocation0]]
  $region94: #{gcn_model_vae_forward.4} parent=0
    _
  %s8 = ssub.s32 1, %s6
  %s9 = scalar_select 0, %s8, %s6
  $region1: #{gcn_model_vae_forward.4} parent=0
    #allocation2 [shape = 'u8[16384]{0}', space=vmem, size = 0x4000, scoped, tag = 'output window, operand 2']
    loop: start=0, step=1, limit=6
    $region2: #{gcn_model_vae_forward.4} parent=1 // loop_pre_header
      _
    $region3: #{gcn_model_vae_forward.4} parent=1 // loop_header
      %s11 = sphi 0, %s15
      %p12 = scmp.ge.s32.totalorder %s11, 6
      %s18 = sphi 0, %s30
      %s19 = sphi 0, %s26
      %s20 = sphi 0, %s18
      %s21 = sphi 0, %s19
      %s22 = sphi 0, %s20
      %s23 = sphi 0, %s21
      %s35 = sphi 0, %s37
      %s38 = sphi 0, %s35
      %s39 = sphi 0, %s38
      %s55 = sphi 0, %s39
      %s61 = sphi 0, %s63
      %s64 = sphi 0, %s61
      %s65 = sphi 0, %s64
      %s81 = sphi 0, %s65
      %s89 = sphi 0, %s91
      %s92 = sphi 0, %s89
      %s93 = sphi 0, %s92
      %s109 = sphi 0, %s93
      %s117 = sphi 0, %s119
      %s120 = sphi 0, %s117
      %s121 = sphi 0, %s120
      %s137 = sphi 0, %s121
      %s145 = sphi 0, %s147
      %s148 = sphi 0, %s145
      %s149 = sphi 0, %s148
      %s165 = sphi 0, %s149
    $region4: #{gcn_model_vae_forward.4} parent=1 // loop_header_branch
      %14 = sbr.rel (%p12) target = $region8
    $region5: #{gcn_model_vae_forward.4} parent=1 // loop_body
      %s16 = ssub.s32 %s11, 1
      %s17 = ssub.s32 %s11, 2
      %s24 = sadd.s32 1, %s19
      %p25 = scmp.ge.s32.totalorder %s24, 2
      %s26 = scalar_select %p25, 0, %s24
      %s27 = sadd.s32 1, %s18
      %s28 = scalar_select %p25, %s27, %s18
      %p29 = scmp.ge.s32.totalorder %s28, 2
      %s30 = scalar_select %p29, 0, %s28
      %s31 = ssub.s32 %s18, %s30
      %s32 = ssub.s32 %s19, %s26
      %s33 = sor.u32 %s31, %s32
      %p34 = scmp.eq.s32.totalorder %s33, 0
      %s36 = sadd.s32 %s35, 1
      %s37 = scalar_select %p34, %s35, %s36
      %p40 = pneg %p34
      %p41 = scmp.eq.s32.totalorder %s11, 3
      %p42 = por %p40, %p41
      %p43 = scmp.ne.s32.totalorder %s35, %s38
      %p44 = scmp.eq.s32.totalorder %s11, 0
      %p45 = por %p43, %p44
      %p46 = scmp.ne.s32.totalorder %s35, %s38
      %p47 = scmp.eq.s32.totalorder %s16, 3
      %p48 = por %p46, %p47
      %p49 = scmp.ne.s32.totalorder %s38, %s39
      %p50 = scmp.eq.s32.totalorder %s16, 0
      %p51 = por %p49, %p50
      %p52 = scmp.ne.s32.totalorder %s38, %s39
      %p53 = scmp.eq.s32.totalorder %s17, 3
      %p54 = por %p52, %p53
      %p56 = scmp.ne.s32.totalorder %s39, %s55
      %p57 = scmp.eq.s32.totalorder %s17, 0
      %p58 = por %p56, %p57
      %s59 = ssub.s32 %s18, %s30
      %p60 = scmp.eq.s32.totalorder %s59, 0
      %s62 = sadd.s32 %s61, 1
      %s63 = scalar_select %p60, %s61, %s62
      %p66 = pneg %p60
      %p67 = scmp.eq.s32.totalorder %s11, 3
      %p68 = por %p66, %p67
      %p69 = scmp.ne.s32.totalorder %s61, %s64
      %p70 = scmp.eq.s32.totalorder %s11, 0
      %p71 = por %p69, %p70
      %p72 = scmp.ne.s32.totalorder %s61, %s64
      %p73 = scmp.eq.s32.totalorder %s16, 3
      %p74 = por %p72, %p73
      %p75 = scmp.ne.s32.totalorder %s64, %s65
      %p76 = scmp.eq.s32.totalorder %s16, 0
      %p77 = por %p75, %p76
      %p78 = scmp.ne.s32.totalorder %s64, %s65
      %p79 = scmp.eq.s32.totalorder %s17, 3
      %p80 = por %p78, %p79
      %p82 = scmp.ne.s32.totalorder %s65, %s81
      %p83 = scmp.eq.s32.totalorder %s17, 0
      %p84 = por %p82, %p83
      %s85 = ssub.s32 %s18, %s30
      %s86 = ssub.s32 %s19, %s26
      %s87 = sor.u32 %s85, %s86
      %p88 = scmp.eq.s32.totalorder %s87, 0
      %s90 = sadd.s32 %s89, 1
      %s91 = scalar_select %p88, %s89, %s90
      %p94 = pneg %p88
      %p95 = scmp.eq.s32.totalorder %s11, 3
      %p96 = por %p94, %p95
      %p97 = scmp.ne.s32.totalorder %s89, %s92
      %p98 = scmp.eq.s32.totalorder %s11, 0
      %p99 = por %p97, %p98
      %p100 = scmp.ne.s32.totalorder %s89, %s92
      %p101 = scmp.eq.s32.totalorder %s16, 3
      %p102 = por %p100, %p101
      %p103 = scmp.ne.s32.totalorder %s92, %s93
      %p104 = scmp.eq.s32.totalorder %s16, 0
      %p105 = por %p103, %p104
      %p106 = scmp.ne.s32.totalorder %s92, %s93
      %p107 = scmp.eq.s32.totalorder %s17, 3
      %p108 = por %p106, %p107
      %p110 = scmp.ne.s32.totalorder %s93, %s109
      %p111 = scmp.eq.s32.totalorder %s17, 0
      %p112 = por %p110, %p111
      %s113 = ssub.s32 %s18, %s30
      %s114 = ssub.s32 %s19, %s26
      %s115 = sor.u32 %s113, %s114
      %p116 = scmp.eq.s32.totalorder %s115, 0
      %s118 = sadd.s32 %s117, 1
      %s119 = scalar_select %p116, %s117, %s118
      %p122 = pneg %p116
      %p123 = scmp.eq.s32.totalorder %s11, 3
      %p124 = por %p122, %p123
      %p125 = scmp.ne.s32.totalorder %s117, %s120
      %p126 = scmp.eq.s32.totalorder %s11, 0
      %p127 = por %p125, %p126
      %p128 = scmp.ne.s32.totalorder %s117, %s120
      %p129 = scmp.eq.s32.totalorder %s16, 3
      %p130 = por %p128, %p129
      %p131 = scmp.ne.s32.totalorder %s120, %s121
      %p132 = scmp.eq.s32.totalorder %s16, 0
      %p133 = por %p131, %p132
      %p134 = scmp.ne.s32.totalorder %s120, %s121
      %p135 = scmp.eq.s32.totalorder %s17, 3
      %p136 = por %p134, %p135
      %p138 = scmp.ne.s32.totalorder %s121, %s137
      %p139 = scmp.eq.s32.totalorder %s17, 0
      %p140 = por %p138, %p139
      %s141 = ssub.s32 %s18, %s30
      %s142 = ssub.s32 %s19, %s26
      %s143 = sor.u32 %s141, %s142
      %p144 = scmp.eq.s32.totalorder %s143, 0
      %s146 = sadd.s32 %s145, 1
      %s147 = scalar_select %p144, %s145, %s146
      %p150 = pneg %p144
      %p151 = scmp.eq.s32.totalorder %s11, 3
      %p152 = por %p150, %p151
      %p153 = scmp.ne.s32.totalorder %s145, %s148
      %p154 = scmp.eq.s32.totalorder %s11, 0
      %p155 = por %p153, %p154
      %p156 = scmp.ne.s32.totalorder %s145, %s148
      %p157 = scmp.eq.s32.totalorder %s16, 3
      %p158 = por %p156, %p157
      %p159 = scmp.ne.s32.totalorder %s148, %s149
      %p160 = scmp.eq.s32.totalorder %s16, 0
      %p161 = por %p159, %p160
      %p162 = scmp.ne.s32.totalorder %s148, %s149
      %p163 = scmp.eq.s32.totalorder %s17, 3
      %p164 = por %p162, %p163
      %p166 = scmp.ne.s32.totalorder %s149, %s165
      %p167 = scmp.eq.s32.totalorder %s17, 0
      %p168 = por %p166, %p167
      %p169 = scmp.le.s32.totalorder 1, %s11
      %p170 = scmp.lt.s32.totalorder %s11, 5
      %p171 = pnand %p169, %p170
      %p172 = pneg %p171
      // Predicated region
      $region9: #{gcn_model_vae_forward.4} parent=5 // pred_check
        _
      $region10: #{gcn_model_vae_forward.4} parent=5 // pred_check_branch
        %174 = sbr.rel (%p171) target = $region12
      $region11: #{gcn_model_vae_forward.4} parent=5 // pred_region
        %s175 = ssub.s32 %s11, 1
      $region12: #{gcn_model_vae_forward.4} parent=5 // pred_fallthru
        _
      %p176 = scmp.lt.s32.totalorder %s11, 4
      // Predicated region
      $region13: #{gcn_model_vae_forward.4} parent=5 // pred_check
        %p177 = pneg %p176
      $region14: #{gcn_model_vae_forward.4} parent=5 // pred_check_branch
        %179 = sbr.rel (%p177) target = $region16
      $region15: #{gcn_model_vae_forward.4} parent=5 // pred_region
        // Predicated region
        $region17: #{gcn_model_vae_forward.4} parent=15 // pred_check
          %p180 = pneg %p45
        $region18: #{gcn_model_vae_forward.4} parent=15 // pred_check_branch
          %182 = sbr.rel (%p180) target = $region20
        $region19: #{gcn_model_vae_forward.4} parent=15 // pred_region
          %s183 = smul.u32 16, %s19
          %p184 = scmp.lt.s32.totalorder %s18, 1
          %s185 = scalar_select %p184, %s18, 1
          %p186 = scmp.lt.s32.totalorder %s183, 31
          %s187 = scalar_select %p186, %s183, 31
          %s188 = smul.addr %s187, 2
          %s189 = smul.addr %s185, 64
          %s190 = sadd.s32 %s188, %s189
          %s191 = smul.addr %s190, 4
          %s192 = scalar_lea.vmem %s0, %s191
          %s193 = smul.u32 16, %s19
        $region20: #{gcn_model_vae_forward.4} parent=15 // pred_fallthru
          _
        // Predicated region
        $region21: #{gcn_model_vae_forward.4} parent=15 // pred_check
          %p194 = pneg %p71
        $region22: #{gcn_model_vae_forward.4} parent=15 // pred_check_branch
          %196 = sbr.rel (%p194) target = $region24
        $region23: #{gcn_model_vae_forward.4} parent=15 // pred_region
          %p197 = scmp.lt.s32.totalorder %s18, 1
          %s198 = scalar_select %p197, %s18, 1
          %s199 = smul.addr %s198, 32
          %s200 = smul.addr %s199, 4
          %s201 = scalar_lea.vmem %s1, %s200
        $region24: #{gcn_model_vae_forward.4} parent=15 // pred_fallthru
          _
      $region16: #{gcn_model_vae_forward.4} parent=5 // pred_fallthru
        _
      %p202 = scmp.le.s32.totalorder 1, %s11
      %p203 = scmp.lt.s32.totalorder %s11, 5
      %p204 = pnand %p202, %p203
      %p205 = pneg %p204
      // Predicated region
      $region25: #{gcn_model_vae_forward.4} parent=5 // pred_check
        _
      $region26: #{gcn_model_vae_forward.4} parent=5 // pred_check_branch
        %207 = sbr.rel (%p204) target = $region28
      $region27: #{gcn_model_vae_forward.4} parent=5 // pred_region
        %s208 = ssub.s32 %s11, 1
        %s209 = smul.u32 16, %s21
        %p210 = scmp.lt.s32.totalorder %s20, 1
        %s211 = scalar_select %p210, %s20, 1
        %p212 = scmp.lt.s32.totalorder %s209, 31
        %s213 = scalar_select %p212, %s209, 31
        %s214 = smul.addr %s213, 2
        %s215 = smul.addr %s211, 64
        %s216 = sadd.s32 %s214, %s215
        %s217 = smul.addr %s216, 4
        %s218 = scalar_lea.vmem %s0, %s217
        %p219 = pneg %p51
        %p220 = pneg %p48
        %p221 = scmp.lt.s32.totalorder %s20, 1
        %s222 = scalar_select %p221, %s20, 1
        %s223 = smul.addr %s222, 32
        %s224 = smul.addr %s223, 4
        %s225 = scalar_lea.vmem %s1, %s224
        %p226 = pneg %p77
        %p227 = pneg %p74
        %p228 = pneg %p105
        %p229 = pneg %p102
        %s230 = smul.u32 16, %s21
        %p231 = scmp.lt.s32.totalorder %s20, 1
        %s232 = scalar_select %p231, %s20, 1
        %p233 = scmp.lt.s32.totalorder %s230, 31
        %s234 = scalar_select %p233, %s230, 31
        %s235 = smul.addr %s232, 32
        %s236 = sadd.s32 %s234, %s235
        %s237 = smul.addr %s236, 8
        %s238 = scalar_lea.vmem %s2, %s237
        %p239 = pneg %p133
        %p240 = pneg %p130
        %s241 = smul.u32 16, %s21
        %p242 = scmp.lt.s32.totalorder %s20, 1
        %s243 = scalar_select %p242, %s20, 1
        %p244 = scmp.lt.s32.totalorder %s241, 31
        %s245 = scalar_select %p244, %s241, 31
        %s246 = smul.addr %s243, 32
        %s247 = sadd.s32 %s245, %s246
        %s248 = smul.addr %s247, 4
        %s249 = scalar_lea.vmem %s3, %s248
        %p250 = pneg %p161
        %p251 = pneg %p158
        %s252 = sand.u32 %s148, 1
        %s253 = sand.u32 %s148, 1
        %s254 = smul.addr %s253, 16
        %s255 = scalar_lea.vmem [#allocation2], %s254
        %s256 = smul.u32 16, %s21
        %p257 = scmp.lt.s32.totalorder %s20, 1
        %s258 = scalar_select %p257, %s20, 1
        %p259 = scmp.lt.s32.totalorder %s256, 31
        %s260 = scalar_select %p259, %s256, 31
        %s261 = smul.addr %s260, 2
        %s262 = smul.addr %s258, 64
        %s263 = sadd.s32 %s261, %s262
        %s264 = smul.addr %s263, 4
        %s265 = scalar_lea.vmem %s0, %s264
        %s266 = smul.u32 16, %s21
        %p267 = scmp.lt.s32.totalorder %s20, 1
        %s268 = scalar_select %p267, %s20, 1
        %s269 = smul.addr %s268, 32
        %s270 = smul.addr %s269, 4
        %s271 = scalar_lea.vmem %s1, %s270
        %s272 = smul.u32 16, %s21
        %p273 = scmp.lt.s32.totalorder %s20, 1
        %s274 = scalar_select %p273, %s20, 1
        %p275 = scmp.lt.s32.totalorder %s272, 31
        %s276 = scalar_select %p275, %s272, 31
        %s277 = smul.addr %s274, 32
        %s278 = sadd.s32 %s276, %s277
        %s279 = smul.addr %s278, 8
        %s280 = scalar_lea.vmem %s2, %s279
        %s281 = smul.u32 16, %s21
        %s282 = smul.u32 16, %s21
        %p283 = scmp.lt.s32.totalorder %s20, 1
        %s284 = scalar_select %p283, %s20, 1
        %p285 = scmp.lt.s32.totalorder %s282, 31
        %s286 = scalar_select %p285, %s282, 31
        %s287 = smul.addr %s284, 32
        %s288 = sadd.s32 %s286, %s287
        %s289 = smul.addr %s288, 4
        %s290 = scalar_lea.vmem %s3, %s289
        %s291 = smul.u32 16, %s21
        %v293 = vld [vmem:[%s265] sm:$0xff]
        %v294 = vld [vmem:[%s265 + $0x8] sm:$0xff]
        %v295 = vld [vmem:[%s265 + $0x10] sm:$0xff]
        %v296 = vld [vmem:[%s265 + $0x18] sm:$0xff]
        %v297 = vld [vmem:[%s265 + $0x20] sm:$0xff]
        %v298 = vld [vmem:[%s265 + $0x28] sm:$0xff]
        %v299 = vld [vmem:[%s265 + $0x30] sm:$0xff]
        %v300 = vld [vmem:[%s265 + $0x38] sm:$0xff]
        %v301 = vld [vmem:[%s265 + $0x40] sm:$0xff]
        %v302 = vld [vmem:[%s265 + $0x48] sm:$0xff]
        %v303 = vld [vmem:[%s265 + $0x50] sm:$0xff]
        %v304 = vld [vmem:[%s265 + $0x58] sm:$0xff]
        %v305 = vld [vmem:[%s265 + $0x60] sm:$0xff]
        %v306 = vld [vmem:[%s265 + $0x68] sm:$0xff]
        %v307 = vld [vmem:[%s265 + $0x70] sm:$0xff]
        %v308 = vld [vmem:[%s265 + $0x78] sm:$0xff]
        %v309 = vld [vmem:[%s271] sm:$0xf]
        %v310 = vld [vmem:[%s271 + $0x4] sm:$0xf]
        %v311 = vld [vmem:[%s271 + $0x8] sm:$0xf]
        %v312 = vld [vmem:[%s271 + $0xc] sm:$0xf]
        %v313 = vld [vmem:[%s271 + $0x10] sm:$0xf]
        %v314 = vld [vmem:[%s271 + $0x14] sm:$0xf]
        %v315 = vld [vmem:[%s271 + $0x18] sm:$0xf]
        %v316 = vld [vmem:[%s271 + $0x1c] sm:$0xf]
        %v317 = vld [vmem:[%s271 + $0x20] sm:$0xf]
        %v318 = vld [vmem:[%s271 + $0x24] sm:$0xf]
        %v319 = vld [vmem:[%s271 + $0x28] sm:$0xf]
        %v320 = vld [vmem:[%s271 + $0x2c] sm:$0xf]
        %v321 = vld [vmem:[%s271 + $0x30] sm:$0xf]
        %v322 = vld [vmem:[%s271 + $0x34] sm:$0xf]
        %v323 = vld [vmem:[%s271 + $0x38] sm:$0xf]
        %v324 = vld [vmem:[%s271 + $0x3c] sm:$0xf]
        %v325 = vld [vmem:[%s271 + $0x40] sm:$0xf]
        %v326 = vld [vmem:[%s271 + $0x44] sm:$0xf]
        %v327 = vld [vmem:[%s271 + $0x48] sm:$0xf]
        %v328 = vld [vmem:[%s271 + $0x4c] sm:$0xf]
        %v329 = vld [vmem:[%s271 + $0x50] sm:$0xf]
        %v330 = vld [vmem:[%s271 + $0x54] sm:$0xf]
        %v331 = vld [vmem:[%s271 + $0x58] sm:$0xf]
        %v332 = vld [vmem:[%s271 + $0x5c] sm:$0xf]
        %v333 = vld [vmem:[%s271 + $0x60] sm:$0xf]
        %v334 = vld [vmem:[%s271 + $0x64] sm:$0xf]
        %v335 = vld [vmem:[%s271 + $0x68] sm:$0xf]
        %v336 = vld [vmem:[%s271 + $0x6c] sm:$0xf]
        %v337 = vld [vmem:[%s271 + $0x70] sm:$0xf]
        %v338 = vld [vmem:[%s271 + $0x74] sm:$0xf]
        %v339 = vld [vmem:[%s271 + $0x78] sm:$0xf]
        %v340 = vld [vmem:[%s271 + $0x7c] sm:$0xf]
        %v357 = vunpack.c.l.b16 %v293
        %v358 = vunpack.c.h.b16 %v293
        %v359 = vunpack.c.l.b16 %v294
        %v360 = vunpack.c.h.b16 %v294
        %v361 = vunpack.c.l.b16 %v295
        %v362 = vunpack.c.h.b16 %v295
        %v363 = vunpack.c.l.b16 %v296
        %v364 = vunpack.c.h.b16 %v296
        %v365 = vunpack.c.l.b16 %v297
        %v366 = vunpack.c.h.b16 %v297
        %v367 = vunpack.c.l.b16 %v298
        %v368 = vunpack.c.h.b16 %v298
        %v369 = vunpack.c.l.b16 %v299
        %v370 = vunpack.c.h.b16 %v299
        %v371 = vunpack.c.l.b16 %v300
        %v372 = vunpack.c.h.b16 %v300
        %v373 = vunpack.c.l.b16 %v301
        %v374 = vunpack.c.h.b16 %v301
        %v375 = vunpack.c.l.b16 %v302
        %v376 = vunpack.c.h.b16 %v302
        %v377 = vunpack.c.l.b16 %v303
        %v378 = vunpack.c.h.b16 %v303
        %v379 = vunpack.c.l.b16 %v304
        %v380 = vunpack.c.h.b16 %v304
        %v381 = vunpack.c.l.b16 %v305
        %v382 = vunpack.c.h.b16 %v305
        %v383 = vunpack.c.l.b16 %v306
        %v384 = vunpack.c.h.b16 %v306
        %v385 = vunpack.c.l.b16 %v307
        %v386 = vunpack.c.h.b16 %v307
        %v387 = vunpack.c.l.b16 %v308
        %v388 = vunpack.c.h.b16 %v308
        %v389 = vpack.c.b16 %v359, %v357
        %v390 = vpack.c.b16 %v360, %v358
        %v391 = vpack.c.b16 %v363, %v361
        %v392 = vpack.c.b16 %v364, %v362
        %v393 = vpack.c.b16 %v367, %v365
        %v394 = vpack.c.b16 %v368, %v366
        %v395 = vpack.c.b16 %v371, %v369
        %v396 = vpack.c.b16 %v372, %v370
        %v397 = vpack.c.b16 %v375, %v373
        %v398 = vpack.c.b16 %v376, %v374
        %v399 = vpack.c.b16 %v379, %v377
        %v400 = vpack.c.b16 %v380, %v378
        %v401 = vpack.c.b16 %v383, %v381
        %v402 = vpack.c.b16 %v384, %v382
        %v403 = vpack.c.b16 %v387, %v385
        %v404 = vpack.c.b16 %v388, %v386
        %v453 = vunpack.c.l.b16 %v309
        %v454 = vunpack.c.l.b16 %v310
        %v455 = vunpack.c.l.b16 %v311
        %v456 = vunpack.c.l.b16 %v312
        %v457 = vunpack.c.l.b16 %v313
        %v458 = vunpack.c.l.b16 %v314
        %v459 = vunpack.c.l.b16 %v315
        %v460 = vunpack.c.l.b16 %v316
        %v461 = vunpack.c.l.b16 %v317
        %v462 = vunpack.c.l.b16 %v318
        %v463 = vunpack.c.l.b16 %v319
        %v464 = vunpack.c.l.b16 %v320
        %v465 = vunpack.c.l.b16 %v321
        %v466 = vunpack.c.l.b16 %v322
        %v467 = vunpack.c.l.b16 %v323
        %v468 = vunpack.c.l.b16 %v324
        %v469 = vunpack.c.l.b16 %v325
        %v470 = vunpack.c.l.b16 %v326
        %v471 = vunpack.c.l.b16 %v327
        %v472 = vunpack.c.l.b16 %v328
        %v473 = vunpack.c.l.b16 %v329
        %v474 = vunpack.c.l.b16 %v330
        %v475 = vunpack.c.l.b16 %v331
        %v476 = vunpack.c.l.b16 %v332
        %v477 = vunpack.c.l.b16 %v333
        %v478 = vunpack.c.l.b16 %v334
        %v479 = vunpack.c.l.b16 %v335
        %v480 = vunpack.c.l.b16 %v336
        %v481 = vunpack.c.l.b16 %v337
        %v482 = vunpack.c.l.b16 %v338
        %v483 = vunpack.c.l.b16 %v339
        %v484 = vunpack.c.l.b16 %v340
        %v485 = vpack.c.b16 %v454, %v453
        %v486 = vpack.c.b16 %v456, %v455
        %v487 = vpack.c.b16 %v458, %v457
        %v488 = vpack.c.b16 %v460, %v459
        %v489 = vpack.c.b16 %v462, %v461
        %v490 = vpack.c.b16 %v464, %v463
        %v491 = vpack.c.b16 %v466, %v465
        %v492 = vpack.c.b16 %v468, %v467
        %v493 = vpack.c.b16 %v470, %v469
        %v494 = vpack.c.b16 %v472, %v471
        %v495 = vpack.c.b16 %v474, %v473
        %v496 = vpack.c.b16 %v476, %v475
        %v497 = vpack.c.b16 %v478, %v477
        %v498 = vpack.c.b16 %v480, %v479
        %v499 = vpack.c.b16 %v482, %v481
        %v500 = vpack.c.b16 %v484, %v483
        %517 = vmatprep.subr.bf16.mxu0 0
        %518 = vmatpush1.bf16.msra.mxu0 %v485
        %519 = vmatprep.subr.bf16.mxu0 0
        %520 = vmatpush1.bf16.msra.mxu0 %v486
        %521 = vmatprep.subr.bf16.mxu0 0
        %522 = vmatpush1.bf16.msra.mxu0 %v487
        %523 = vmatprep.subr.bf16.mxu0 0
        %524 = vmatpush1.bf16.msra.mxu0 %v488
        %525 = vmatprep.subr.bf16.mxu0 0
        %526 = vmatpush1.bf16.msra.mxu0 %v489
        %527 = vmatprep.subr.bf16.mxu0 0
        %528 = vmatpush1.bf16.msra.mxu0 %v490
        %529 = vmatprep.subr.bf16.mxu0 0
        %530 = vmatpush1.bf16.msra.mxu0 %v491
        %531 = vmatprep.subr.bf16.mxu0 0
        %532 = vmatpush1.bf16.msra.mxu0 %v492
        %533 = vmatprep.subr.bf16.mxu0 0
        %534 = vmatpush1.bf16.msra.mxu0 %v493
        %535 = vmatprep.subr.bf16.mxu0 0
        %536 = vmatpush1.bf16.msra.mxu0 %v494
        %537 = vmatprep.subr.bf16.mxu0 0
        %538 = vmatpush1.bf16.msra.mxu0 %v495
        %539 = vmatprep.subr.bf16.mxu0 0
        %540 = vmatpush1.bf16.msra.mxu0 %v496
        %541 = vmatprep.subr.bf16.mxu0 0
        %542 = vmatpush1.bf16.msra.mxu0 %v497
        %543 = vmatprep.subr.bf16.mxu0 0
        %544 = vmatpush1.bf16.msra.mxu0 %v498
        %545 = vmatprep.subr.bf16.mxu0 0
        %546 = vmatpush1.bf16.msra.mxu0 %v499
        %547 = vmatprep.subr.bf16.mxu0 0
        %548 = vmatpush1.bf16.msra.mxu0 %v500
        %549 = vmatprep.mubr.bf16.mxu0 %v390
        %550 = vmatmul.mubr.bf16.gmra.mrb[0].mxu0 %v389
        %v551 = vpop.f32.mrb[0].mxu0
        %v552 = vadd.f32 0.0, %v551
        %v553 = vpop.f32.mrb[0].mxu0
        %v554 = vpop.f32.mrb[0].mxu0
        %v555 = vadd.f32 0.0, %v554
        %v556 = vpop.f32.mrb[0].mxu0
        %557 = vmatprep.mubr.bf16.mxu0 %v392
        %558 = vmatmul.mubr.bf16.gmra.mrb[0].mxu0 %v391
        %v559 = vpop.f32.mrb[0].mxu0
        %v560 = vadd.f32 0.0, %v559
        %v561 = vpop.f32.mrb[0].mxu0
        %v562 = vpop.f32.mrb[0].mxu0
        %v563 = vadd.f32 0.0, %v562
        %v564 = vpop.f32.mrb[0].mxu0
        %565 = vmatprep.mubr.bf16.mxu0 %v394
        %566 = vmatmul.mubr.bf16.gmra.mrb[0].mxu0 %v393
        %v567 = vpop.f32.mrb[0].mxu0
        %v568 = vadd.f32 0.0, %v567
        %v569 = vpop.f32.mrb[0].mxu0
        %v570 = vpop.f32.mrb[0].mxu0
        %v571 = vadd.f32 0.0, %v570
        %v572 = vpop.f32.mrb[0].mxu0
        %573 = vmatprep.mubr.bf16.mxu0 %v396
        %574 = vmatmul.mubr.bf16.gmra.mrb[0].mxu0 %v395
        %v575 = vpop.f32.mrb[0].mxu0
        %v576 = vadd.f32 0.0, %v575
        %v577 = vpop.f32.mrb[0].mxu0
        %v578 = vpop.f32.mrb[0].mxu0
        %v579 = vadd.f32 0.0, %v578
        %v580 = vpop.f32.mrb[0].mxu0
        %581 = vmatprep.mubr.bf16.mxu0 %v398
        %582 = vmatmul.mubr.bf16.gmra.mrb[0].mxu0 %v397
        %v583 = vpop.f32.mrb[0].mxu0
        %v584 = vadd.f32 0.0, %v583
        %v585 = vpop.f32.mrb[0].mxu0
        %v586 = vpop.f32.mrb[0].mxu0
        %v587 = vadd.f32 0.0, %v586
        %v588 = vpop.f32.mrb[0].mxu0
        %589 = vmatprep.mubr.bf16.mxu0 %v400
        %590 = vmatmul.mubr.bf16.gmra.mrb[0].mxu0 %v399
        %v591 = vpop.f32.mrb[0].mxu0
        %v592 = vadd.f32 0.0, %v591
        %v593 = vpop.f32.mrb[0].mxu0
        %v594 = vpop.f32.mrb[0].mxu0
        %v595 = vadd.f32 0.0, %v594
        %v596 = vpop.f32.mrb[0].mxu0
        %597 = vmatprep.mubr.bf16.mxu0 %v402
        %598 = vmatmul.mubr.bf16.gmra.mrb[0].mxu0 %v401
        %v599 = vpop.f32.mrb[0].mxu0
        %v600 = vadd.f32 0.0, %v599
        %v601 = vpop.f32.mrb[0].mxu0
        %v602 = vpop.f32.mrb[0].mxu0
        %v603 = vadd.f32 0.0, %v602
        %v604 = vpop.f32.mrb[0].mxu0
        %605 = vmatprep.mubr.bf16.mxu0 %v404
        %606 = vmatmul.mubr.bf16.gmra.mrb[0].mxu0 %v403
        %v607 = vpop.f32.mrb[0].mxu0
        %v608 = vadd.f32 0.0, %v607
        %v609 = vpop.f32.mrb[0].mxu0
        %v610 = vpop.f32.mrb[0].mxu0
        %v611 = vadd.f32 0.0, %v610
        %v612 = vpop.f32.mrb[0].mxu0
        %613 = vdwg.mxu0
        %614 = vst [vmem:[%s280] sm:$0xff] %v552
        %615 = vst [vmem:[%s280 + $0x8] sm:$0xff] %v555
        %616 = vst [vmem:[%s280 + $0x10] sm:$0xff] %v560
        %617 = vst [vmem:[%s280 + $0x18] sm:$0xff] %v563
        %618 = vst [vmem:[%s280 + $0x20] sm:$0xff] %v568
        %619 = vst [vmem:[%s280 + $0x28] sm:$0xff] %v571
        %620 = vst [vmem:[%s280 + $0x30] sm:$0xff] %v576
        %621 = vst [vmem:[%s280 + $0x38] sm:$0xff] %v579
        %622 = vst [vmem:[%s280 + $0x40] sm:$0xff] %v584
        %623 = vst [vmem:[%s280 + $0x48] sm:$0xff] %v587
        %624 = vst [vmem:[%s280 + $0x50] sm:$0xff] %v592
        %625 = vst [vmem:[%s280 + $0x58] sm:$0xff] %v595
        %626 = vst [vmem:[%s280 + $0x60] sm:$0xff] %v600
        %627 = vst [vmem:[%s280 + $0x68] sm:$0xff] %v603
        %628 = vst [vmem:[%s280 + $0x70] sm:$0xff] %v608
        %629 = vst [vmem:[%s280 + $0x78] sm:$0xff] %v611
        %v630 = vpack.c.bf16 %v555, %v552
        %v631 = vpack.c.bf16 %v563, %v560
        %v632 = vpack.c.bf16 %v571, %v568
        %v633 = vpack.c.bf16 %v579, %v576
        %v634 = vpack.c.bf16 %v587, %v584
        %v635 = vpack.c.bf16 %v595, %v592
        %v636 = vpack.c.bf16 %v603, %v600
        %v637 = vpack.c.bf16 %v611, %v608
        %v646 = vunpack.c.l.b16 %v630
        %v647 = vunpack.c.h.b16 %v630
        %v648 = vunpack.c.l.b16 %v631
        %v649 = vunpack.c.h.b16 %v631
        %v650 = vunpack.c.l.b16 %v632
        %v651 = vunpack.c.h.b16 %v632
        %v652 = vunpack.c.l.b16 %v633
        %v653 = vunpack.c.h.b16 %v633
        %v654 = vunpack.c.l.b16 %v634
        %v655 = vunpack.c.h.b16 %v634
        %v656 = vunpack.c.l.b16 %v635
        %v657 = vunpack.c.h.b16 %v635
        %v658 = vunpack.c.l.b16 %v636
        %v659 = vunpack.c.h.b16 %v636
        %v660 = vunpack.c.l.b16 %v637
        %v661 = vunpack.c.h.b16 %v637
        %v662 = vpack.c.b16 %v646, %v646
        %v663 = vpack.c.b16 %v647, %v647
        %v664 = vpack.c.b16 %v648, %v648
        %v665 = vpack.c.b16 %v649, %v649
        %v666 = vpack.c.b16 %v650, %v650
        %v667 = vpack.c.b16 %v651, %v651
        %v668 = vpack.c.b16 %v652, %v652
        %v669 = vpack.c.b16 %v653, %v653
        %v670 = vpack.c.b16 %v654, %v654
        %v671 = vpack.c.b16 %v655, %v655
        %v672 = vpack.c.b16 %v656, %v656
        %v673 = vpack.c.b16 %v657, %v657
        %v674 = vpack.c.b16 %v658, %v658
        %v675 = vpack.c.b16 %v659, %v659
        %v676 = vpack.c.b16 %v660, %v660
        %v677 = vpack.c.b16 %v661, %v661
        %vm694 = vcmask 257024
        %695 = vst.msk [vmem:[%s290] sm:$0xf] %vm694, %v662
        %696 = vst.msk [vmem:[%s290 + $0x4] sm:$0xf] %vm694, %v663
        %697 = vst.msk [vmem:[%s290 + $0x8] sm:$0xf] %vm694, %v664
        %698 = vst.msk [vmem:[%s290 + $0xc] sm:$0xf] %vm694, %v665
        %699 = vst.msk [vmem:[%s290 + $0x10] sm:$0xf] %vm694, %v666
        %700 = vst.msk [vmem:[%s290 + $0x14] sm:$0xf] %vm694, %v667
        %701 = vst.msk [vmem:[%s290 + $0x18] sm:$0xf] %vm694, %v668
        %702 = vst.msk [vmem:[%s290 + $0x1c] sm:$0xf] %vm694, %v669
        %703 = vst.msk [vmem:[%s290 + $0x20] sm:$0xf] %vm694, %v670
        %704 = vst.msk [vmem:[%s290 + $0x24] sm:$0xf] %vm694, %v671
        %705 = vst.msk [vmem:[%s290 + $0x28] sm:$0xf] %vm694, %v672
        %706 = vst.msk [vmem:[%s290 + $0x2c] sm:$0xf] %vm694, %v673
        %707 = vst.msk [vmem:[%s290 + $0x30] sm:$0xf] %vm694, %v674
        %708 = vst.msk [vmem:[%s290 + $0x34] sm:$0xf] %vm694, %v675
        %709 = vst.msk [vmem:[%s290 + $0x38] sm:$0xf] %vm694, %v676
        %710 = vst.msk [vmem:[%s290 + $0x3c] sm:$0xf] %vm694, %v677
        %711 = vxpose.xlu0.b32.start [1/16] %v552, 128
        %712 = vxpose.xlu0.b32.cont [2/16] %v555, 128
        %713 = vxpose.xlu0.b32.cont [3/16] %v560, 128
        %714 = vxpose.xlu0.b32.cont [4/16] %v563, 128
        %715 = vxpose.xlu0.b32.cont [5/16] %v568, 128
        %716 = vxpose.xlu0.b32.cont [6/16] %v571, 128
        %717 = vxpose.xlu0.b32.cont [7/16] %v576, 128
        %718 = vxpose.xlu0.b32.cont [8/16] %v579, 128
        %719 = vxpose.xlu0.b32.cont [9/16] %v584, 128
        %720 = vxpose.xlu0.b32.cont [10/16] %v587, 128
        %721 = vxpose.xlu0.b32.cont [11/16] %v592, 128
        %722 = vxpose.xlu0.b32.cont [12/16] %v595, 128
        %723 = vxpose.xlu0.b32.cont [13/16] %v600, 128
        %724 = vxpose.xlu0.b32.cont [14/16] %v603, 128
        %725 = vxpose.xlu0.b32.cont [15/16] %v608, 128
        %726 = vxpose.xlu0.b32.end [16/16] %v611, 128
        %v727 = vpop.trf.xlu0
        %v728 = vpop.trf.xlu0
        %v729 = vpop.trf.xlu0
        %v730 = vpop.trf.xlu0
        %v731 = vpop.trf.xlu0
        %v732 = vpop.trf.xlu0
        %v733 = vpop.trf.xlu0
        %v734 = vpop.trf.xlu0
        %v735 = vpop.trf.xlu0
        %v736 = vpop.trf.xlu0
        %v737 = vpop.trf.xlu0
        %v738 = vpop.trf.xlu0
        %v739 = vpop.trf.xlu0
        %v740 = vpop.trf.xlu0
        %v741 = vpop.trf.xlu0
        %v742 = vpop.trf.xlu0
        %v743 = vpack.c.bf16 %v728, %v727
        %v744 = vpack.c.bf16 %v730, %v729
        %v747 = vunpack.c.l.b16 %v743
        %v748 = vunpack.c.h.b16 %v743
        %v749 = vunpack.c.l.b16 %v744
        %v750 = vunpack.c.h.b16 %v744
        %v751 = vpack.c.b16 %v747, %v747
        %v752 = vpack.c.b16 %v748, %v748
        %v753 = vpack.c.b16 %v749, %v749
        %v754 = vpack.c.b16 %v750, %v750
        %759 = vst [vmem:[%s255] sm:$0xf] %v751
        %760 = vst [vmem:[%s255 + $0x4] sm:$0xf] %v752
        %761 = vst [vmem:[%s255 + $0x8] sm:$0xf] %v753
        %762 = vst [vmem:[%s255 + $0xc] sm:$0xf] %v754
        %s763 = smul.u32 16, %s21
        %p764 = scmp.lt.s32.totalorder %s20, 1
        %s765 = scalar_select %p764, %s20, 1
        %p766 = scmp.lt.s32.totalorder %s763, 31
        %s767 = scalar_select %p766, %s763, 31
        %s768 = smul.addr %s765, 32
        %s769 = sadd.s32 %s767, %s768
        %s770 = smul.addr %s769, 8
        %s771 = scalar_lea.vmem %s2, %s770
        %s772 = smul.u32 16, %s21
        %p773 = scmp.lt.s32.totalorder %s20, 1
        %s774 = scalar_select %p773, %s20, 1
        %p775 = scmp.lt.s32.totalorder %s772, 31
        %s776 = scalar_select %p775, %s772, 31
        %s777 = smul.addr %s774, 32
        %s778 = sadd.s32 %s776, %s777
        %s779 = smul.addr %s778, 4
        %s780 = scalar_lea.vmem %s3, %s779
        %s781 = sand.u32 %s148, 1
        %s782 = sand.u32 %s148, 1
        %s783 = smul.addr %s782, 16
        %s784 = scalar_lea.vmem [#allocation2], %s783
        // Predicated region
        $region29: #{gcn_model_vae_forward.4} parent=27 // pred_check
          %p785 = pneg %p102
        $region30: #{gcn_model_vae_forward.4} parent=27 // pred_check_branch
          %787 = sbr.rel (%p785) target = $region32
        $region31: #{gcn_model_vae_forward.4} parent=27 // pred_region
          %s788 = smul.u32 16, %s21
        $region32: #{gcn_model_vae_forward.4} parent=27 // pred_fallthru
          _
        // Predicated region
        $region33: #{gcn_model_vae_forward.4} parent=27 // pred_check
          %p789 = pneg %p130
        $region34: #{gcn_model_vae_forward.4} parent=27 // pred_check_branch
          %791 = sbr.rel (%p789) target = $region36
        $region35: #{gcn_model_vae_forward.4} parent=27 // pred_region
          %s792 = smul.u32 16, %s21
        $region36: #{gcn_model_vae_forward.4} parent=27 // pred_fallthru
          _
        // Predicated region
        $region37: #{gcn_model_vae_forward.4} parent=27 // pred_check
          %p793 = pneg %p158
        $region38: #{gcn_model_vae_forward.4} parent=27 // pred_check_branch
          %795 = sbr.rel (%p793) target = $region40
        $region39: #{gcn_model_vae_forward.4} parent=27 // pred_region
          %s796 = smul.addr %s20, 8
          %s797 = sadd.s32 %s21, %s796
          %s798 = smul.addr %s797, 4
          %s799 = scalar_lea.vmem %s4, %s798
          // Predicated region
          $region41: #{gcn_model_vae_forward.4} parent=39 // pred_check
            _
          $region42: #{gcn_model_vae_forward.4} parent=39 // pred_check_branch
            %801 = sbr.rel (0) target = $region44
          $region43: #{gcn_model_vae_forward.4} parent=39 // pred_region
            // Predicated region
            $region45: #{gcn_model_vae_forward.4} parent=43 // pred_check
              _
            $region46: #{gcn_model_vae_forward.4} parent=43 // pred_check_branch
              %803 = sbr.rel target = $region48
            $region47: #{gcn_model_vae_forward.4} parent=43 // pred_region
              // Predicated region
              $region60: #{gcn_model_vae_forward.4} parent=47 // pred_check
                _
              $region61: #{gcn_model_vae_forward.4} parent=47 // pred_check_branch
                %824 = sbr.rel (0) target = $region63
              $region62: #{gcn_model_vae_forward.4} parent=47 // pred_region
                loop: start=0, step=1, limit=1
                $region64: #{gcn_model_vae_forward.4} parent=62 // loop_pre_header
                  _
                $region65: #{gcn_model_vae_forward.4} parent=62 // loop_header
                  %s826 = sphi 0, %s830
                  %p827 = scmp.ge.s32.totalorder %s826, 1
                  %s831 = sphi %s784, %s784
                  %s832 = sphi %s799, %s799
                $region66: #{gcn_model_vae_forward.4} parent=62 // loop_header_branch
                  %829 = sbr.rel (%p827) target = $region70
                $region67: #{gcn_model_vae_forward.4} parent=62 // loop_body
                  _
                $region68: #{gcn_model_vae_forward.4} parent=62 // loop_footer
                  %s830 = sadd.s32 1, %s826
                $region69: #{gcn_model_vae_forward.4} parent=62 // loop_footer_branch
                  %825 = sbr.rel target = $region65
                $region70: #{gcn_model_vae_forward.4} parent=62 // loop_exit
                  _
                loop: start=0, step=1, limit=1
                $region71: #{gcn_model_vae_forward.4} parent=62 // loop_pre_header
                  _
                $region72: #{gcn_model_vae_forward.4} parent=62 // loop_header
                  %s835 = sphi 0, %s839
                  %p836 = scmp.ge.s32.totalorder %s835, 1
                  %s840 = sphi %s784, %s784
                  %s841 = sphi %s799, %s799
                $region73: #{gcn_model_vae_forward.4} parent=62 // loop_header_branch
                  %838 = sbr.rel (%p836) target = $region77
                $region74: #{gcn_model_vae_forward.4} parent=62 // loop_body
                  %v842 = vld [vmem:[%s840] sm:$0xf]
                  %843 = vst [vmem:[%s841] sm:$0xf] %v842
                  %v844 = vld [vmem:[%s840 + $0x4] sm:$0xf]
                  %845 = vst [vmem:[%s841 + $0x8] sm:$0xf] %v844
                  %v846 = vld [vmem:[%s840 + $0x8] sm:$0xf]
                  %847 = vst [vmem:[%s841 + $0x10] sm:$0xf] %v846
                  %v848 = vld [vmem:[%s840 + $0xc] sm:$0xf]
                  %849 = vst [vmem:[%s841 + $0x18] sm:$0xf] %v848
                $region75: #{gcn_model_vae_forward.4} parent=62 // loop_footer
                  %s839 = sadd.s32 1, %s835
                $region76: #{gcn_model_vae_forward.4} parent=62 // loop_footer_branch
                  %834 = sbr.rel target = $region72
                $region77: #{gcn_model_vae_forward.4} parent=62 // loop_exit
                  _
              $region63: #{gcn_model_vae_forward.4} parent=47 // pred_fallthru
                _
            $region48: #{gcn_model_vae_forward.4} parent=43 // pred_fallthru
              _
            // Predicated region
            $region49: #{gcn_model_vae_forward.4} parent=43 // pred_check
              _
            $region50: #{gcn_model_vae_forward.4} parent=43 // pred_check_branch
              %805 = sbr.rel (0) target = $region52
            $region51: #{gcn_model_vae_forward.4} parent=43 // pred_region
              loop: start=0, step=1, limit=1
              $region53: #{gcn_model_vae_forward.4} parent=51 // loop_pre_header
                _
              $region54: #{gcn_model_vae_forward.4} parent=51 // loop_header
                %s808 = sphi 0, %s812
                %p809 = scmp.ge.s32.totalorder %s808, 1
                %s813 = sphi %s784, %s784
                %s814 = sphi %s799, %s799
              $region55: #{gcn_model_vae_forward.4} parent=51 // loop_header_branch
                %811 = sbr.rel (%p809) target = $region59
              $region56: #{gcn_model_vae_forward.4} parent=51 // loop_body
                %v815 = vld [vmem:[%s813] sm:$0xf]
                %816 = vst [vmem:[%s814] sm:$0xf] %v815
                %v817 = vld [vmem:[%s813 + $0x4] sm:$0xf]
                %818 = vst [vmem:[%s814 + $0x8] sm:$0xf] %v817
                %v819 = vld [vmem:[%s813 + $0x8] sm:$0xf]
                %820 = vst [vmem:[%s814 + $0x10] sm:$0xf] %v819
                %v821 = vld [vmem:[%s813 + $0xc] sm:$0xf]
                %822 = vst [vmem:[%s814 + $0x18] sm:$0xf] %v821
              $region57: #{gcn_model_vae_forward.4} parent=51 // loop_footer
                %s812 = sadd.s32 1, %s808
              $region58: #{gcn_model_vae_forward.4} parent=51 // loop_footer_branch
                %807 = sbr.rel target = $region54
              $region59: #{gcn_model_vae_forward.4} parent=51 // loop_exit
                _
            $region52: #{gcn_model_vae_forward.4} parent=43 // pred_fallthru
              _
          $region44: #{gcn_model_vae_forward.4} parent=39 // pred_fallthru
            _
          %850 = vnop
        $region40: #{gcn_model_vae_forward.4} parent=27 // pred_fallthru
          _
      $region28: #{gcn_model_vae_forward.4} parent=5 // pred_fallthru
        _
      %p851 = scmp.le.s32.totalorder 2, %s11
      // Predicated region
      $region78: #{gcn_model_vae_forward.4} parent=5 // pred_check
        %p852 = pneg %p851
      $region79: #{gcn_model_vae_forward.4} parent=5 // pred_check_branch
        %854 = sbr.rel (%p852) target = $region81
      $region80: #{gcn_model_vae_forward.4} parent=5 // pred_region
        %s855 = ssub.s32 %s11, 2
        // Predicated region
        $region82: #{gcn_model_vae_forward.4} parent=80 // pred_check
          %p856 = pneg %p108
        $region83: #{gcn_model_vae_forward.4} parent=80 // pred_check_branch
          %858 = sbr.rel (%p856) target = $region85
        $region84: #{gcn_model_vae_forward.4} parent=80 // pred_region
          %s859 = smul.u32 16, %s23
          %p860 = scmp.lt.s32.totalorder %s22, 1
          %s861 = scalar_select %p860, %s22, 1
          %p862 = scmp.lt.s32.totalorder %s859, 31
          %s863 = scalar_select %p862, %s859, 31
          %s864 = smul.addr %s861, 32
          %s865 = sadd.s32 %s863, %s864
          %s866 = smul.addr %s865, 8
          %s867 = scalar_lea.vmem %s2, %s866
        $region85: #{gcn_model_vae_forward.4} parent=80 // pred_fallthru
          _
        // Predicated region
        $region86: #{gcn_model_vae_forward.4} parent=80 // pred_check
          %p868 = pneg %p136
        $region87: #{gcn_model_vae_forward.4} parent=80 // pred_check_branch
          %870 = sbr.rel (%p868) target = $region89
        $region88: #{gcn_model_vae_forward.4} parent=80 // pred_region
          %s871 = smul.u32 16, %s23
          %p872 = scmp.lt.s32.totalorder %s22, 1
          %s873 = scalar_select %p872, %s22, 1
          %p874 = scmp.lt.s32.totalorder %s871, 31
          %s875 = scalar_select %p874, %s871, 31
          %s876 = smul.addr %s873, 32
          %s877 = sadd.s32 %s875, %s876
          %s878 = smul.addr %s877, 4
          %s879 = scalar_lea.vmem %s3, %s878
        $region89: #{gcn_model_vae_forward.4} parent=80 // pred_fallthru
          _
        // Predicated region
        $region90: #{gcn_model_vae_forward.4} parent=80 // pred_check
          %p880 = pneg %p164
        $region91: #{gcn_model_vae_forward.4} parent=80 // pred_check_branch
          %882 = sbr.rel (%p880) target = $region93
        $region92: #{gcn_model_vae_forward.4} parent=80 // pred_region
          %s883 = sand.u32 %s149, 1
          %s884 = sand.u32 %s149, 1
          %s885 = smul.addr %s884, 16
          %s886 = scalar_lea.vmem [#allocation2], %s885
        $region93: #{gcn_model_vae_forward.4} parent=80 // pred_fallthru
          _
      $region81: #{gcn_model_vae_forward.4} parent=5 // pred_fallthru
        _
    $region6: #{gcn_model_vae_forward.4} parent=1 // loop_footer
      %s15 = sadd.s32 1, %s11
    $region7: #{gcn_model_vae_forward.4} parent=1 // loop_footer_branch
      %10 = sbr.rel target = $region3
    $region8: #{gcn_model_vae_forward.4} parent=1 // loop_exit
      _

// kernel: gcn_model_vae_forward.3
$region0: #{gcn_model_vae_forward.3}
  #allocation0 [shape = 'u32[]', space=smem, size = 0x4, offset = 0x4, fixed_abs, tag = 'smem constant byte address 0x4 - core index']
  #allocation1 [shape = 'u32[144,128]{1,0:T(1,128)}', space=vmem, size = 0x12000, scoped, tag = 'internal scratch']
  %s0 = inlined_call_operand.vmem [shape: bf16[2,256,64], index: 0, kind: input, shape index: {}]
  %s1 = inlined_call_operand.vmem [shape: bf16[2,256,256], index: 1, kind: input, shape index: {}]
  %s2 = inlined_call_operand.vmem [shape: bf16[64,128], index: 2, kind: input, shape index: {}]
  %s3 = inlined_call_operand.vmem [shape: bf16[2,256,128], index: 3, kind: output, shape index: {}]
  %s4 = sld [smem:[#allocation0]]
  $region45: #{gcn_model_vae_forward.3} parent=0
    _
  %s6 = ssub.s32 1, %s4
  %s7 = scalar_select 0, %s6, %s4
  loop: start=0, step=1, limit=6
  $region2: #{gcn_model_vae_forward.3} parent=0 // loop_pre_header
    _
  $region3: #{gcn_model_vae_forward.3} parent=0 // loop_header
    %s9 = sphi 0, %s13
    %p10 = scmp.ge.s32.totalorder %s9, 6
    %s16 = sphi 0, %s28
    %s17 = sphi 0, %s24
    %s18 = sphi 0, %s16
    %s19 = sphi 0, %s17
    %s20 = sphi 0, %s18
    %s21 = sphi 0, %s19
    %s31 = sphi 0, %s33
    %s34 = sphi 0, %s31
    %s35 = sphi 0, %s34
    %s51 = sphi 0, %s35
    %s59 = sphi 0, %s61
    %s62 = sphi 0, %s59
    %s63 = sphi 0, %s62
    %s79 = sphi 0, %s63
    %s83 = sphi 0, %s83
    %s85 = sphi 0, %s83
    %s86 = sphi 0, %s85
    %s100 = sphi 0, %s86
    %s108 = sphi 0, %s110
    %s111 = sphi 0, %s108
    %s112 = sphi 0, %s111
    %s128 = sphi 0, %s112
  $region4: #{gcn_model_vae_forward.3} parent=0 // loop_header_branch
    %12 = sbr.rel (%p10) target = $region8
  $region5: #{gcn_model_vae_forward.3} parent=0 // loop_body
    %s14 = ssub.s32 %s9, 1
    %s15 = ssub.s32 %s9, 2
    %s22 = sadd.s32 1, %s17
    %p23 = scmp.ge.s32.totalorder %s22, 2
    %s24 = scalar_select %p23, 0, %s22
    %s25 = sadd.s32 1, %s16
    %s26 = scalar_select %p23, %s25, %s16
    %p27 = scmp.ge.s32.totalorder %s26, 2
    %s28 = scalar_select %p27, 0, %s26
    %s29 = ssub.s32 %s16, %s28
    %p30 = scmp.eq.s32.totalorder %s29, 0
    %s32 = sadd.s32 %s31, 1
    %s33 = scalar_select %p30, %s31, %s32
    %p36 = pneg %p30
    %p37 = scmp.eq.s32.totalorder %s9, 3
    %p38 = por %p36, %p37
    %p39 = scmp.ne.s32.totalorder %s31, %s34
    %p40 = scmp.eq.s32.totalorder %s9, 0
    %p41 = por %p39, %p40
    %p42 = scmp.ne.s32.totalorder %s31, %s34
    %p43 = scmp.eq.s32.totalorder %s14, 3
    %p44 = por %p42, %p43
    %p45 = scmp.ne.s32.totalorder %s34, %s35
    %p46 = scmp.eq.s32.totalorder %s14, 0
    %p47 = por %p45, %p46
    %p48 = scmp.ne.s32.totalorder %s34, %s35
    %p49 = scmp.eq.s32.totalorder %s15, 3
    %p50 = por %p48, %p49
    %p52 = scmp.ne.s32.totalorder %s35, %s51
    %p53 = scmp.eq.s32.totalorder %s15, 0
    %p54 = por %p52, %p53
    %s55 = ssub.s32 %s16, %s28
    %s56 = ssub.s32 %s17, %s24
    %s57 = sor.u32 %s55, %s56
    %p58 = scmp.eq.s32.totalorder %s57, 0
    %s60 = sadd.s32 %s59, 1
    %s61 = scalar_select %p58, %s59, %s60
    %p64 = pneg %p58
    %p65 = scmp.eq.s32.totalorder %s9, 3
    %p66 = por %p64, %p65
    %p67 = scmp.ne.s32.totalorder %s59, %s62
    %p68 = scmp.eq.s32.totalorder %s9, 0
    %p69 = por %p67, %p68
    %p70 = scmp.ne.s32.totalorder %s59, %s62
    %p71 = scmp.eq.s32.totalorder %s14, 3
    %p72 = por %p70, %p71
    %p73 = scmp.ne.s32.totalorder %s62, %s63
    %p74 = scmp.eq.s32.totalorder %s14, 0
    %p75 = por %p73, %p74
    %p76 = scmp.ne.s32.totalorder %s62, %s63
    %p77 = scmp.eq.s32.totalorder %s15, 3
    %p78 = por %p76, %p77
    %p80 = scmp.ne.s32.totalorder %s63, %s79
    %p81 = scmp.eq.s32.totalorder %s15, 0
    %p82 = por %p80, %p81
    %s84 = sadd.s32 %s83, 1
    %p87 = scmp.eq.s32.totalorder %s9, 3
    %p88 = scmp.ne.s32.totalorder %s83, %s85
    %p89 = scmp.eq.s32.totalorder %s9, 0
    %p90 = por %p88, %p89
    %p91 = scmp.ne.s32.totalorder %s83, %s85
    %p92 = scmp.eq.s32.totalorder %s14, 3
    %p93 = por %p91, %p92
    %p94 = scmp.ne.s32.totalorder %s85, %s86
    %p95 = scmp.eq.s32.totalorder %s14, 0
    %p96 = por %p94, %p95
    %p97 = scmp.ne.s32.totalorder %s85, %s86
    %p98 = scmp.eq.s32.totalorder %s15, 3
    %p99 = por %p97, %p98
    %p101 = scmp.ne.s32.totalorder %s86, %s100
    %p102 = scmp.eq.s32.totalorder %s15, 0
    %p103 = por %p101, %p102
    %s104 = ssub.s32 %s16, %s28
    %s105 = ssub.s32 %s17, %s24
    %s106 = sor.u32 %s104, %s105
    %p107 = scmp.eq.s32.totalorder %s106, 0
    %s109 = sadd.s32 %s108, 1
    %s110 = scalar_select %p107, %s108, %s109
    %p113 = pneg %p107
    %p114 = scmp.eq.s32.totalorder %s9, 3
    %p115 = por %p113, %p114
    %p116 = scmp.ne.s32.totalorder %s108, %s111
    %p117 = scmp.eq.s32.totalorder %s9, 0
    %p118 = por %p116, %p117
    %p119 = scmp.ne.s32.totalorder %s108, %s111
    %p120 = scmp.eq.s32.totalorder %s14, 3
    %p121 = por %p119, %p120
    %p122 = scmp.ne.s32.totalorder %s111, %s112
    %p123 = scmp.eq.s32.totalorder %s14, 0
    %p124 = por %p122, %p123
    %p125 = scmp.ne.s32.totalorder %s111, %s112
    %p126 = scmp.eq.s32.totalorder %s15, 3
    %p127 = por %p125, %p126
    %p129 = scmp.ne.s32.totalorder %s112, %s128
    %p130 = scmp.eq.s32.totalorder %s15, 0
    %p131 = por %p129, %p130
    %p132 = scmp.le.s32.totalorder 1, %s9
    %p133 = scmp.lt.s32.totalorder %s9, 5
    %p134 = pnand %p132, %p133
    %p135 = pneg %p134
    // Predicated region
    $region9: #{gcn_model_vae_forward.3} parent=5 // pred_check
      _
    $region10: #{gcn_model_vae_forward.3} parent=5 // pred_check_branch
      %137 = sbr.rel (%p134) target = $region12
    $region11: #{gcn_model_vae_forward.3} parent=5 // pred_region
      %s138 = ssub.s32 %s9, 1
      // Predicated region
      $region13: #{gcn_model_vae_forward.3} parent=11 // pred_check
        %p139 = pneg %p96
      $region14: #{gcn_model_vae_forward.3} parent=11 // pred_check_branch
        %141 = sbr.rel (%p139) target = $region16
      $region15: #{gcn_model_vae_forward.3} parent=11 // pred_region
        _
      $region16: #{gcn_model_vae_forward.3} parent=11 // pred_fallthru
        _
    $region12: #{gcn_model_vae_forward.3} parent=5 // pred_fallthru
      _
    %p142 = scmp.lt.s32.totalorder %s9, 4
    // Predicated region
    $region17: #{gcn_model_vae_forward.3} parent=5 // pred_check
      %p143 = pneg %p142
    $region18: #{gcn_model_vae_forward.3} parent=5 // pred_check_branch
      %145 = sbr.rel (%p143) target = $region20
    $region19: #{gcn_model_vae_forward.3} parent=5 // pred_region
      // Predicated region
      $region21: #{gcn_model_vae_forward.3} parent=19 // pred_check
        %p146 = pneg %p41
      $region22: #{gcn_model_vae_forward.3} parent=19 // pred_check_branch
        %148 = sbr.rel (%p146) target = $region24
      $region23: #{gcn_model_vae_forward.3} parent=19 // pred_region
        %p149 = scmp.lt.s32.totalorder %s16, 1
        %s150 = scalar_select %p149, %s16, 1
        %s151 = smul.addr %s150, 32
        %s152 = smul.addr %s151, 4
        %s153 = scalar_lea.vmem %s0, %s152
      $region24: #{gcn_model_vae_forward.3} parent=19 // pred_fallthru
        _
      // Predicated region
      $region25: #{gcn_model_vae_forward.3} parent=19 // pred_check
        %p154 = pneg %p69
      $region26: #{gcn_model_vae_forward.3} parent=19 // pred_check_branch
        %156 = sbr.rel (%p154) target = $region28
      $region27: #{gcn_model_vae_forward.3} parent=19 // pred_region
        %s157 = smul.u32 16, %s17
        %p158 = scmp.lt.s32.totalorder %s16, 1
        %s159 = scalar_select %p158, %s16, 1
        %p160 = scmp.lt.s32.totalorder %s157, 31
        %s161 = scalar_select %p160, %s157, 31
        %s162 = smul.addr %s161, 2
        %s163 = smul.addr %s159, 64
        %s164 = sadd.s32 %s162, %s163
        %s165 = smul.addr %s164, 4
        %s166 = scalar_lea.vmem %s1, %s165
        %s167 = smul.u32 16, %s17
      $region28: #{gcn_model_vae_forward.3} parent=19 // pred_fallthru
        _
    $region20: #{gcn_model_vae_forward.3} parent=5 // pred_fallthru
      _
    %p168 = scmp.le.s32.totalorder 1, %s9
    %p169 = scmp.lt.s32.totalorder %s9, 5
    %p170 = pnand %p168, %p169
    %p171 = pneg %p170
    // Predicated region
    $region29: #{gcn_model_vae_forward.3} parent=5 // pred_check
      _
    $region30: #{gcn_model_vae_forward.3} parent=5 // pred_check_branch
      %173 = sbr.rel (%p170) target = $region32
    $region31: #{gcn_model_vae_forward.3} parent=5 // pred_region
      %s174 = ssub.s32 %s9, 1
      %p175 = scmp.lt.s32.totalorder %s18, 1
      %s176 = scalar_select %p175, %s18, 1
      %s177 = smul.addr %s176, 32
      %s178 = smul.addr %s177, 4
      %s179 = scalar_lea.vmem %s0, %s178
      %p180 = pneg %p47
      %p181 = pneg %p44
      %s182 = smul.u32 16, %s19
      %p183 = scmp.lt.s32.totalorder %s18, 1
      %s184 = scalar_select %p183, %s18, 1
      %p185 = scmp.lt.s32.totalorder %s182, 31
      %s186 = scalar_select %p185, %s182, 31
      %s187 = smul.addr %s186, 2
      %s188 = smul.addr %s184, 64
      %s189 = sadd.s32 %s187, %s188
      %s190 = smul.addr %s189, 4
      %s191 = scalar_lea.vmem %s1, %s190
      %p192 = pneg %p75
      %p193 = pneg %p72
      %p194 = pneg %p96
      %p195 = pneg %p93
      %p196 = pneg %p124
      %p197 = pneg %p121
      %s198 = smul.u32 16, %s19
      %p199 = scmp.lt.s32.totalorder %s18, 1
      %s200 = scalar_select %p199, %s18, 1
      %p201 = scmp.lt.s32.totalorder %s198, 31
      %s202 = scalar_select %p201, %s198, 31
      %s203 = smul.addr %s200, 32
      %s204 = sadd.s32 %s202, %s203
      %s205 = smul.addr %s204, 4
      %s206 = scalar_lea.vmem %s3, %s205
      %p207 = scmp.lt.s32.totalorder %s18, 1
      %s208 = scalar_select %p207, %s18, 1
      %s209 = smul.addr %s208, 32
      %s210 = smul.addr %s209, 4
      %s211 = scalar_lea.vmem %s0, %s210
      %s212 = smul.u32 16, %s19
      %p213 = scmp.lt.s32.totalorder %s18, 1
      %s214 = scalar_select %p213, %s18, 1
      %p215 = scmp.lt.s32.totalorder %s212, 31
      %s216 = scalar_select %p215, %s212, 31
      %s217 = smul.addr %s216, 2
      %s218 = smul.addr %s214, 64
      %s219 = sadd.s32 %s217, %s218
      %s220 = smul.addr %s219, 4
      %s221 = scalar_lea.vmem %s1, %s220
      %s222 = smul.u32 16, %s19
      %s223 = smul.u32 16, %s19
      %p224 = scmp.lt.s32.totalorder %s18, 1
      %s225 = scalar_select %p224, %s18, 1
      %p226 = scmp.lt.s32.totalorder %s223, 31
      %s227 = scalar_select %p226, %s223, 31
      %s228 = smul.addr %s225, 32
      %s229 = sadd.s32 %s227, %s228
      %s230 = smul.addr %s229, 4
      %s231 = scalar_lea.vmem %s3, %s230
      %s232 = smul.u32 16, %s19
      %v234 = vld [vmem:[%s221] sm:$0xff]
      %v235 = vld [vmem:[%s221 + $0x8] sm:$0xff]
      %v236 = vld [vmem:[%s221 + $0x10] sm:$0xff]
      %v237 = vld [vmem:[%s221 + $0x18] sm:$0xff]
      %v238 = vld [vmem:[%s221 + $0x20] sm:$0xff]
      %v239 = vld [vmem:[%s221 + $0x28] sm:$0xff]
      %v240 = vld [vmem:[%s221 + $0x30] sm:$0xff]
      %v241 = vld [vmem:[%s221 + $0x38] sm:$0xff]
      %v242 = vld [vmem:[%s221 + $0x40] sm:$0xff]
      %v243 = vld [vmem:[%s221 + $0x48] sm:$0xff]
      %v244 = vld [vmem:[%s221 + $0x50] sm:$0xff]
      %v245 = vld [vmem:[%s221 + $0x58] sm:$0xff]
      %v246 = vld [vmem:[%s221 + $0x60] sm:$0xff]
      %v247 = vld [vmem:[%s221 + $0x68] sm:$0xff]
      %v248 = vld [vmem:[%s221 + $0x70] sm:$0xff]
      %v249 = vld [vmem:[%s221 + $0x78] sm:$0xff]
      %v250 = vld [vmem:[%s211] sm:$0xf]
      %v251 = vld [vmem:[%s211 + $0x4] sm:$0xf]
      %v252 = vld [vmem:[%s211 + $0x8] sm:$0xf]
      %v253 = vld [vmem:[%s211 + $0xc] sm:$0xf]
      %v254 = vld [vmem:[%s211 + $0x10] sm:$0xf]
      %v255 = vld [vmem:[%s211 + $0x14] sm:$0xf]
      %v256 = vld [vmem:[%s211 + $0x18] sm:$0xf]
      %v257 = vld [vmem:[%s211 + $0x1c] sm:$0xf]
      %v258 = vld [vmem:[%s211 + $0x20] sm:$0xf]
      %v259 = vld [vmem:[%s211 + $0x24] sm:$0xf]
      %v260 = vld [vmem:[%s211 + $0x28] sm:$0xf]
      %v261 = vld [vmem:[%s211 + $0x2c] sm:$0xf]
      %v262 = vld [vmem:[%s211 + $0x30] sm:$0xf]
      %v263 = vld [vmem:[%s211 + $0x34] sm:$0xf]
      %v264 = vld [vmem:[%s211 + $0x38] sm:$0xf]
      %v265 = vld [vmem:[%s211 + $0x3c] sm:$0xf]
      %v266 = vld [vmem:[%s211 + $0x40] sm:$0xf]
      %v267 = vld [vmem:[%s211 + $0x44] sm:$0xf]
      %v268 = vld [vmem:[%s211 + $0x48] sm:$0xf]
      %v269 = vld [vmem:[%s211 + $0x4c] sm:$0xf]
      %v270 = vld [vmem:[%s211 + $0x50] sm:$0xf]
      %v271 = vld [vmem:[%s211 + $0x54] sm:$0xf]
      %v272 = vld [vmem:[%s211 + $0x58] sm:$0xf]
      %v273 = vld [vmem:[%s211 + $0x5c] sm:$0xf]
      %v274 = vld [vmem:[%s211 + $0x60] sm:$0xf]
      %v275 = vld [vmem:[%s211 + $0x64] sm:$0xf]
      %v276 = vld [vmem:[%s211 + $0x68] sm:$0xf]
      %v277 = vld [vmem:[%s211 + $0x6c] sm:$0xf]
      %v278 = vld [vmem:[%s211 + $0x70] sm:$0xf]
      %v279 = vld [vmem:[%s211 + $0x74] sm:$0xf]
      %v280 = vld [vmem:[%s211 + $0x78] sm:$0xf]
      %v281 = vld [vmem:[%s211 + $0x7c] sm:$0xf]
      %v298 = vunpack.c.l.b16 %v234
      %v299 = vunpack.c.h.b16 %v234
      %v300 = vunpack.c.l.b16 %v235
      %v301 = vunpack.c.h.b16 %v235
      %v302 = vunpack.c.l.b16 %v236
      %v303 = vunpack.c.h.b16 %v236
      %v304 = vunpack.c.l.b16 %v237
      %v305 = vunpack.c.h.b16 %v237
      %v306 = vunpack.c.l.b16 %v238
      %v307 = vunpack.c.h.b16 %v238
      %v308 = vunpack.c.l.b16 %v239
      %v309 = vunpack.c.h.b16 %v239
      %v310 = vunpack.c.l.b16 %v240
      %v311 = vunpack.c.h.b16 %v240
      %v312 = vunpack.c.l.b16 %v241
      %v313 = vunpack.c.h.b16 %v241
      %v314 = vunpack.c.l.b16 %v242
      %v315 = vunpack.c.h.b16 %v242
      %v316 = vunpack.c.l.b16 %v243
      %v317 = vunpack.c.h.b16 %v243
      %v318 = vunpack.c.l.b16 %v244
      %v319 = vunpack.c.h.b16 %v244
      %v320 = vunpack.c.l.b16 %v245
      %v321 = vunpack.c.h.b16 %v245
      %v322 = vunpack.c.l.b16 %v246
      %v323 = vunpack.c.h.b16 %v246
      %v324 = vunpack.c.l.b16 %v247
      %v325 = vunpack.c.h.b16 %v247
      %v326 = vunpack.c.l.b16 %v248
      %v327 = vunpack.c.h.b16 %v248
      %v328 = vunpack.c.l.b16 %v249
      %v329 = vunpack.c.h.b16 %v249
      %v330 = vpack.c.b16 %v300, %v298
      %v331 = vpack.c.b16 %v301, %v299
      %v332 = vpack.c.b16 %v304, %v302
      %v333 = vpack.c.b16 %v305, %v303
      %v334 = vpack.c.b16 %v308, %v306
      %v335 = vpack.c.b16 %v309, %v307
      %v336 = vpack.c.b16 %v312, %v310
      %v337 = vpack.c.b16 %v313, %v311
      %v338 = vpack.c.b16 %v316, %v314
      %v339 = vpack.c.b16 %v317, %v315
      %v340 = vpack.c.b16 %v320, %v318
      %v341 = vpack.c.b16 %v321, %v319
      %v342 = vpack.c.b16 %v324, %v322
      %v343 = vpack.c.b16 %v325, %v323
      %v344 = vpack.c.b16 %v328, %v326
      %v345 = vpack.c.b16 %v329, %v327
      %v394 = vunpack.c.l.b16 %v250
      %v395 = vunpack.c.l.b16 %v251
      %v396 = vunpack.c.l.b16 %v252
      %v397 = vunpack.c.l.b16 %v253
      %v398 = vunpack.c.l.b16 %v254
      %v399 = vunpack.c.l.b16 %v255
      %v400 = vunpack.c.l.b16 %v256
      %v401 = vunpack.c.l.b16 %v257
      %v402 = vunpack.c.l.b16 %v258
      %v403 = vunpack.c.l.b16 %v259
      %v404 = vunpack.c.l.b16 %v260
      %v405 = vunpack.c.l.b16 %v261
      %v406 = vunpack.c.l.b16 %v262
      %v407 = vunpack.c.l.b16 %v263
      %v408 = vunpack.c.l.b16 %v264
      %v409 = vunpack.c.l.b16 %v265
      %v410 = vunpack.c.l.b16 %v266
      %v411 = vunpack.c.l.b16 %v267
      %v412 = vunpack.c.l.b16 %v268
      %v413 = vunpack.c.l.b16 %v269
      %v414 = vunpack.c.l.b16 %v270
      %v415 = vunpack.c.l.b16 %v271
      %v416 = vunpack.c.l.b16 %v272
      %v417 = vunpack.c.l.b16 %v273
      %v418 = vunpack.c.l.b16 %v274
      %v419 = vunpack.c.l.b16 %v275
      %v420 = vunpack.c.l.b16 %v276
      %v421 = vunpack.c.l.b16 %v277
      %v422 = vunpack.c.l.b16 %v278
      %v423 = vunpack.c.l.b16 %v279
      %v424 = vunpack.c.l.b16 %v280
      %v425 = vunpack.c.l.b16 %v281
      %v426 = vpack.c.b16 %v395, %v394
      %v427 = vpack.c.b16 %v397, %v396
      %v428 = vpack.c.b16 %v399, %v398
      %v429 = vpack.c.b16 %v401, %v400
      %v430 = vpack.c.b16 %v403, %v402
      %v431 = vpack.c.b16 %v405, %v404
      %v432 = vpack.c.b16 %v407, %v406
      %v433 = vpack.c.b16 %v409, %v408
      %v434 = vpack.c.b16 %v411, %v410
      %v435 = vpack.c.b16 %v413, %v412
      %v436 = vpack.c.b16 %v415, %v414
      %v437 = vpack.c.b16 %v417, %v416
      %v438 = vpack.c.b16 %v419, %v418
      %v439 = vpack.c.b16 %v421, %v420
      %v440 = vpack.c.b16 %v423, %v422
      %v441 = vpack.c.b16 %v425, %v424
      %458 = vmatprep.subr.bf16.mxu0 0
      %459 = vmatpush1.bf16.msra.mxu0 %v426
      %460 = vmatprep.subr.bf16.mxu0 0
      %461 = vmatpush1.bf16.msra.mxu0 %v427
      %462 = vmatprep.subr.bf16.mxu0 0
      %463 = vmatpush1.bf16.msra.mxu0 %v428
      %464 = vmatprep.subr.bf16.mxu0 0
      %465 = vmatpush1.bf16.msra.mxu0 %v429
      %466 = vmatprep.subr.bf16.mxu0 0
      %467 = vmatpush1.bf16.msra.mxu0 %v430
      %468 = vmatprep.subr.bf16.mxu0 0
      %469 = vmatpush1.bf16.msra.mxu0 %v431
      %470 = vmatprep.subr.bf16.mxu0 0
      %471 = vmatpush1.bf16.msra.mxu0 %v432
      %472 = vmatprep.subr.bf16.mxu0 0
      %473 = vmatpush1.bf16.msra.mxu0 %v433
      %474 = vmatprep.subr.bf16.mxu0 0
      %475 = vmatpush1.bf16.msra.mxu0 %v434
      %476 = vmatprep.subr.bf16.mxu0 0
      %477 = vmatpush1.bf16.msra.mxu0 %v435
      %478 = vmatprep.subr.bf16.mxu0 0
      %479 = vmatpush1.bf16.msra.mxu0 %v436
      %480 = vmatprep.subr.bf16.mxu0 0
      %481 = vmatpush1.bf16.msra.mxu0 %v437
      %482 = vmatprep.subr.bf16.mxu0 0
      %483 = vmatpush1.bf16.msra.mxu0 %v438
      %484 = vmatprep.subr.bf16.mxu0 0
      %485 = vmatpush1.bf16.msra.mxu0 %v439
      %486 = vmatprep.subr.bf16.mxu0 0
      %487 = vmatpush1.bf16.msra.mxu0 %v440
      %488 = vmatprep.subr.bf16.mxu0 0
      %489 = vmatpush1.bf16.msra.mxu0 %v441
      %490 = vmatprep.mubr.bf16.mxu0 %v331
      %491 = vmatmul.mubr.bf16.gmra.mrb[0].mxu0 %v330
      %v492 = vpop.f32.mrb[0].mxu0
      %v493 = vadd.f32 0.0, %v492
      %v494 = vpop.f32.mrb[0].mxu0
      %v495 = vpop.f32.mrb[0].mxu0
      %v496 = vadd.f32 0.0, %v495
      %v497 = vpop.f32.mrb[0].mxu0
      %498 = vmatprep.mubr.bf16.mxu0 %v333
      %499 = vmatmul.mubr.bf16.gmra.mrb[0].mxu0 %v332
      %v500 = vpop.f32.mrb[0].mxu0
      %v501 = vadd.f32 0.0, %v500
      %v502 = vpop.f32.mrb[0].mxu0
      %v503 = vpop.f32.mrb[0].mxu0
      %v504 = vadd.f32 0.0, %v503
      %v505 = vpop.f32.mrb[0].mxu0
      %506 = vmatprep.mubr.bf16.mxu0 %v335
      %507 = vmatmul.mubr.bf16.gmra.mrb[0].mxu0 %v334
      %v508 = vpop.f32.mrb[0].mxu0
      %v509 = vadd.f32 0.0, %v508
      %v510 = vpop.f32.mrb[0].mxu0
      %v511 = vpop.f32.mrb[0].mxu0
      %v512 = vadd.f32 0.0, %v511
      %v513 = vpop.f32.mrb[0].mxu0
      %514 = vmatprep.mubr.bf16.mxu0 %v337
      %515 = vmatmul.mubr.bf16.gmra.mrb[0].mxu0 %v336
      %v516 = vpop.f32.mrb[0].mxu0
      %v517 = vadd.f32 0.0, %v516
      %v518 = vpop.f32.mrb[0].mxu0
      %v519 = vpop.f32.mrb[0].mxu0
      %v520 = vadd.f32 0.0, %v519
      %v521 = vpop.f32.mrb[0].mxu0
      %522 = vmatprep.mubr.bf16.mxu0 %v339
      %523 = vmatmul.mubr.bf16.gmra.mrb[0].mxu0 %v338
      %v524 = vpop.f32.mrb[0].mxu0
      %v525 = vadd.f32 0.0, %v524
      %v526 = vpop.f32.mrb[0].mxu0
      %v527 = vpop.f32.mrb[0].mxu0
      %v528 = vadd.f32 0.0, %v527
      %v529 = vpop.f32.mrb[0].mxu0
      %530 = vmatprep.mubr.bf16.mxu0 %v341
      %531 = vmatmul.mubr.bf16.gmra.mrb[0].mxu0 %v340
      %v532 = vpop.f32.mrb[0].mxu0
      %v533 = vadd.f32 0.0, %v532
      %v534 = vpop.f32.mrb[0].mxu0
      %v535 = vpop.f32.mrb[0].mxu0
      %v536 = vadd.f32 0.0, %v535
      %v537 = vpop.f32.mrb[0].mxu0
      %538 = vmatprep.mubr.bf16.mxu0 %v343
      %539 = vmatmul.mubr.bf16.gmra.mrb[0].mxu0 %v342
      %v540 = vpop.f32.mrb[0].mxu0
      %v541 = vadd.f32 0.0, %v540
      %v542 = vpop.f32.mrb[0].mxu0
      %v543 = vpop.f32.mrb[0].mxu0
      %v544 = vadd.f32 0.0, %v543
      %v545 = vpop.f32.mrb[0].mxu0
      %546 = vmatprep.mubr.bf16.mxu0 %v345
      %547 = vmatmul.mubr.bf16.gmra.mrb[0].mxu0 %v344
      %v548 = vpop.f32.mrb[0].mxu0
      %v549 = vadd.f32 0.0, %v548
      %v550 = vpop.f32.mrb[0].mxu0
      %v551 = vpop.f32.mrb[0].mxu0
      %v552 = vadd.f32 0.0, %v551
      %v553 = vpop.f32.mrb[0].mxu0
      %554 = vdwg.mxu0
      %v555 = vmax.f32 %v493, 0.0
      %v556 = vmax.f32 %v496, 0.0
      %v557 = vmax.f32 %v501, 0.0
      %v558 = vmax.f32 %v504, 0.0
      %v559 = vmax.f32 %v509, 0.0
      %v560 = vmax.f32 %v512, 0.0
      %v561 = vmax.f32 %v517, 0.0
      %v562 = vmax.f32 %v520, 0.0
      %v563 = vmax.f32 %v525, 0.0
      %v564 = vmax.f32 %v528, 0.0
      %v565 = vmax.f32 %v533, 0.0
      %v566 = vmax.f32 %v536, 0.0
      %v567 = vmax.f32 %v541, 0.0
      %v568 = vmax.f32 %v544, 0.0
      %v569 = vmax.f32 %v549, 0.0
      %v570 = vmax.f32 %v552, 0.0
      %v571 = vpack.c.bf16 %v556, %v555
      %v572 = vpack.c.bf16 %v558, %v557
      %v573 = vpack.c.bf16 %v560, %v559
      %v574 = vpack.c.bf16 %v562, %v561
      %v575 = vpack.c.bf16 %v564, %v563
      %v576 = vpack.c.bf16 %v566, %v565
      %v577 = vpack.c.bf16 %v568, %v567
      %v578 = vpack.c.bf16 %v570, %v569
      %v579 = vld [vmem:[%s2] sm:$0xf]
      %v580 = vld [vmem:[%s2 + $0x4] sm:$0xf]
      %v581 = vld [vmem:[%s2 + $0x8] sm:$0xf]
      %v582 = vld [vmem:[%s2 + $0xc] sm:$0xf]
      %v583 = vld [vmem:[%s2 + $0x10] sm:$0xf]
      %v584 = vld [vmem:[%s2 + $0x14] sm:$0xf]
      %v585 = vld [vmem:[%s2 + $0x18] sm:$0xf]
      %v586 = vld [vmem:[%s2 + $0x1c] sm:$0xf]
      %v595 = vunpack.c.l.b16 %v579
      %v596 = vunpack.c.l.b16 %v580
      %v597 = vunpack.c.l.b16 %v581
      %v598 = vunpack.c.l.b16 %v582
      %v599 = vunpack.c.l.b16 %v583
      %v600 = vunpack.c.l.b16 %v584
      %v601 = vunpack.c.l.b16 %v585
      %v602 = vunpack.c.l.b16 %v586
      %v603 = vpack.c.b16 %v596, %v595
      %v604 = vpack.c.b16 %v598, %v597
      %v605 = vpack.c.b16 %v600, %v599
      %v606 = vpack.c.b16 %v602, %v601
      %vm611 = vcmask 523264
      %v613 = vsel %vm611, %v571, 0
      %v616 = vsel %vm611, %v572, 0
      %v619 = vsel %vm611, %v573, 0
      %v622 = vsel %vm611, %v574, 0
      %v625 = vsel %vm611, %v575, 0
      %v628 = vsel %vm611, %v576, 0
      %v631 = vsel %vm611, %v577, 0
      %v634 = vsel %vm611, %v578, 0
      %636 = vmatprep.subr.bf16.mxu0 0
      %637 = vmatpush1.bf16.msra.mxu0 %v603
      %638 = vmatprep.subr.bf16.mxu0 0
      %639 = vmatpush1.bf16.msra.mxu0 %v604
      %640 = vmatprep.subr.bf16.mxu0 0
      %641 = vmatpush1.bf16.msra.mxu0 %v605
      %642 = vmatprep.subr.bf16.mxu0 0
      %643 = vmatpush1.bf16.msra.mxu0 %v606
      %644 = vmatprep.subr.bf16.mxu0 0
      %645 = vmatpush1.bf16.msra.mxu0 0
      %646 = vmatprep.subr.bf16.mxu0 0
      %647 = vmatpush1.bf16.msra.mxu0 0
      %648 = vmatprep.subr.bf16.mxu0 0
      %649 = vmatpush1.bf16.msra.mxu0 0
      %650 = vmatprep.subr.bf16.mxu0 0
      %651 = vmatpush1.bf16.msra.mxu0 0
      %652 = vmatprep.subr.bf16.mxu0 0
      %653 = vmatpush1.bf16.msra.mxu0 0
      %654 = vmatprep.subr.bf16.mxu0 0
      %655 = vmatpush1.bf16.msra.mxu0 0
      %656 = vmatprep.subr.bf16.mxu0 0
      %657 = vmatpush1.bf16.msra.mxu0 0
      %658 = vmatprep.subr.bf16.mxu0 0
      %659 = vmatpush1.bf16.msra.mxu0 0
      %660 = vmatprep.subr.bf16.mxu0 0
      %661 = vmatpush1.bf16.msra.mxu0 0
      %662 = vmatprep.subr.bf16.mxu0 0
      %663 = vmatpush1.bf16.msra.mxu0 0
      %664 = vmatprep.subr.bf16.mxu0 0
      %665 = vmatpush1.bf16.msra.mxu0 0
      %666 = vmatprep.subr.bf16.mxu0 0
      %667 = vmatpush1.bf16.msra.mxu0 0
      %668 = vmatprep.mubr.bf16.mxu0 0
      %669 = vmatmul.mubr.bf16.gmra.mrb[0].mxu0 %v613
      %v670 = vpop.f32.mrb[0].mxu0
      %v671 = vadd.f32 0.0, %v670
      %v672 = vpop.f32.mrb[0].mxu0
      %v673 = vpop.f32.mrb[0].mxu0
      %v674 = vadd.f32 0.0, %v673
      %v675 = vpop.f32.mrb[0].mxu0
      %676 = vmatprep.mubr.bf16.mxu0 0
      %677 = vmatmul.mubr.bf16.gmra.mrb[0].mxu0 %v616
      %v678 = vpop.f32.mrb[0].mxu0
      %v679 = vadd.f32 0.0, %v678
      %v680 = vpop.f32.mrb[0].mxu0
      %v681 = vpop.f32.mrb[0].mxu0
      %v682 = vadd.f32 0.0, %v681
      %v683 = vpop.f32.mrb[0].mxu0
      %684 = vmatprep.mubr.bf16.mxu0 0
      %685 = vmatmul.mubr.bf16.gmra.mrb[0].mxu0 %v619
      %v686 = vpop.f32.mrb[0].mxu0
      %v687 = vadd.f32 0.0, %v686
      %v688 = vpop.f32.mrb[0].mxu0
      %v689 = vpop.f32.mrb[0].mxu0
      %v690 = vadd.f32 0.0, %v689
      %v691 = vpop.f32.mrb[0].mxu0
      %692 = vmatprep.mubr.bf16.mxu0 0
      %693 = vmatmul.mubr.bf16.gmra.mrb[0].mxu0 %v622
      %v694 = vpop.f32.mrb[0].mxu0
      %v695 = vadd.f32 0.0, %v694
      %v696 = vpop.f32.mrb[0].mxu0
      %v697 = vpop.f32.mrb[0].mxu0
      %v698 = vadd.f32 0.0, %v697
      %v699 = vpop.f32.mrb[0].mxu0
      %700 = vmatprep.mubr.bf16.mxu0 0
      %701 = vmatmul.mubr.bf16.gmra.mrb[0].mxu0 %v625
      %v702 = vpop.f32.mrb[0].mxu0
      %v703 = vadd.f32 0.0, %v702
      %v704 = vpop.f32.mrb[0].mxu0
      %v705 = vpop.f32.mrb[0].mxu0
      %v706 = vadd.f32 0.0, %v705
      %v707 = vpop.f32.mrb[0].mxu0
      %708 = vmatprep.mubr.bf16.mxu0 0
      %709 = vmatmul.mubr.bf16.gmra.mrb[0].mxu0 %v628
      %v710 = vpop.f32.mrb[0].mxu0
      %v711 = vadd.f32 0.0, %v710
      %v712 = vpop.f32.mrb[0].mxu0
      %v713 = vpop.f32.mrb[0].mxu0
      %v714 = vadd.f32 0.0, %v713
      %v715 = vpop.f32.mrb[0].mxu0
      %716 = vmatprep.mubr.bf16.mxu0 0
      %717 = vmatmul.mubr.bf16.gmra.mrb[0].mxu0 %v631
      %v718 = vpop.f32.mrb[0].mxu0
      %v719 = vadd.f32 0.0, %v718
      %v720 = vpop.f32.mrb[0].mxu0
      %v721 = vpop.f32.mrb[0].mxu0
      %v722 = vadd.f32 0.0, %v721
      %v723 = vpop.f32.mrb[0].mxu0
      %724 = vmatprep.mubr.bf16.mxu0 0
      %725 = vmatmul.mubr.bf16.gmra.mrb[0].mxu0 %v634
      %v726 = vpop.f32.mrb[0].mxu0
      %v727 = vadd.f32 0.0, %v726
      %v728 = vpop.f32.mrb[0].mxu0
      %v729 = vpop.f32.mrb[0].mxu0
      %v730 = vadd.f32 0.0, %v729
      %v731 = vpop.f32.mrb[0].mxu0
      %732 = vdwg.mxu0
      %v733 = vpack.c.bf16 %v674, %v671
      %v734 = vpack.c.bf16 %v682, %v679
      %v735 = vpack.c.bf16 %v690, %v687
      %v736 = vpack.c.bf16 %v698, %v695
      %v737 = vpack.c.bf16 %v706, %v703
      %v738 = vpack.c.bf16 %v714, %v711
      %v739 = vpack.c.bf16 %v722, %v719
      %v740 = vpack.c.bf16 %v730, %v727
      %v749 = vunpack.c.l.b16 %v733
      %v750 = vunpack.c.h.b16 %v733
      %v751 = vunpack.c.l.b16 %v734
      %v752 = vunpack.c.h.b16 %v734
      %v753 = vunpack.c.l.b16 %v735
      %v754 = vunpack.c.h.b16 %v735
      %v755 = vunpack.c.l.b16 %v736
      %v756 = vunpack.c.h.b16 %v736
      %v757 = vunpack.c.l.b16 %v737
      %v758 = vunpack.c.h.b16 %v737
      %v759 = vunpack.c.l.b16 %v738
      %v760 = vunpack.c.h.b16 %v738
      %v761 = vunpack.c.l.b16 %v739
      %v762 = vunpack.c.h.b16 %v739
      %v763 = vunpack.c.l.b16 %v740
      %v764 = vunpack.c.h.b16 %v740
      %v765 = vpack.c.b16 %v749, %v749
      %v766 = vpack.c.b16 %v750, %v750
      %v767 = vpack.c.b16 %v751, %v751
      %v768 = vpack.c.b16 %v752, %v752
      %v769 = vpack.c.b16 %v753, %v753
      %v770 = vpack.c.b16 %v754, %v754
      %v771 = vpack.c.b16 %v755, %v755
      %v772 = vpack.c.b16 %v756, %v756
      %v773 = vpack.c.b16 %v757, %v757
      %v774 = vpack.c.b16 %v758, %v758
      %v775 = vpack.c.b16 %v759, %v759
      %v776 = vpack.c.b16 %v760, %v760
      %v777 = vpack.c.b16 %v761, %v761
      %v778 = vpack.c.b16 %v762, %v762
      %v779 = vpack.c.b16 %v763, %v763
      %v780 = vpack.c.b16 %v764, %v764
      %797 = vst [vmem:[%s231] sm:$0xf] %v765
      %798 = vst [vmem:[%s231 + $0x4] sm:$0xf] %v766
      %799 = vst [vmem:[%s231 + $0x8] sm:$0xf] %v767
      %800 = vst [vmem:[%s231 + $0xc] sm:$0xf] %v768
      %801 = vst [vmem:[%s231 + $0x10] sm:$0xf] %v769
      %802 = vst [vmem:[%s231 + $0x14] sm:$0xf] %v770
      %803 = vst [vmem:[%s231 + $0x18] sm:$0xf] %v771
      %804 = vst [vmem:[%s231 + $0x1c] sm:$0xf] %v772
      %805 = vst [vmem:[%s231 + $0x20] sm:$0xf] %v773
      %806 = vst [vmem:[%s231 + $0x24] sm:$0xf] %v774
      %807 = vst [vmem:[%s231 + $0x28] sm:$0xf] %v775
      %808 = vst [vmem:[%s231 + $0x2c] sm:$0xf] %v776
      %809 = vst [vmem:[%s231 + $0x30] sm:$0xf] %v777
      %810 = vst [vmem:[%s231 + $0x34] sm:$0xf] %v778
      %811 = vst [vmem:[%s231 + $0x38] sm:$0xf] %v779
      %812 = vst [vmem:[%s231 + $0x3c] sm:$0xf] %v780
      %s813 = smul.u32 16, %s19
      %p814 = scmp.lt.s32.totalorder %s18, 1
      %s815 = scalar_select %p814, %s18, 1
      %p816 = scmp.lt.s32.totalorder %s813, 31
      %s817 = scalar_select %p816, %s813, 31
      %s818 = smul.addr %s815, 32
      %s819 = sadd.s32 %s817, %s818
      %s820 = smul.addr %s819, 4
      %s821 = scalar_lea.vmem %s3, %s820
      // Predicated region
      $region33: #{gcn_model_vae_forward.3} parent=31 // pred_check
        %p822 = pneg %p121
      $region34: #{gcn_model_vae_forward.3} parent=31 // pred_check_branch
        %824 = sbr.rel (%p822) target = $region36
      $region35: #{gcn_model_vae_forward.3} parent=31 // pred_region
        %s825 = smul.u32 16, %s19
      $region36: #{gcn_model_vae_forward.3} parent=31 // pred_fallthru
        _
    $region32: #{gcn_model_vae_forward.3} parent=5 // pred_fallthru
      _
    %p826 = scmp.le.s32.totalorder 2, %s9
    // Predicated region
    $region37: #{gcn_model_vae_forward.3} parent=5 // pred_check
      %p827 = pneg %p826
    $region38: #{gcn_model_vae_forward.3} parent=5 // pred_check_branch
      %829 = sbr.rel (%p827) target = $region40
    $region39: #{gcn_model_vae_forward.3} parent=5 // pred_region
      %s830 = ssub.s32 %s9, 2
      // Predicated region
      $region41: #{gcn_model_vae_forward.3} parent=39 // pred_check
        %p831 = pneg %p127
      $region42: #{gcn_model_vae_forward.3} parent=39 // pred_check_branch
        %833 = sbr.rel (%p831) target = $region44
      $region43: #{gcn_model_vae_forward.3} parent=39 // pred_region
        %s834 = smul.u32 16, %s21
        %p835 = scmp.lt.s32.totalorder %s20, 1
        %s836 = scalar_select %p835, %s20, 1
        %p837 = scmp.lt.s32.totalorder %s834, 31
        %s838 = scalar_select %p837, %s834, 31
        %s839 = smul.addr %s836, 32
        %s840 = sadd.s32 %s838, %s839
        %s841 = smul.addr %s840, 4
        %s842 = scalar_lea.vmem %s3, %s841
      $region44: #{gcn_model_vae_forward.3} parent=39 // pred_fallthru
        _
    $region40: #{gcn_model_vae_forward.3} parent=5 // pred_fallthru
      _
  $region6: #{gcn_model_vae_forward.3} parent=0 // loop_footer
    %s13 = sadd.s32 1, %s9
  $region7: #{gcn_model_vae_forward.3} parent=0 // loop_footer_branch
    %8 = sbr.rel target = $region3
  $region8: #{gcn_model_vae_forward.3} parent=0 // loop_exit
    _

// kernel: gcn_model_vae_forward.5
$region0: #{gcn_model_vae_forward.5}
  #allocation0 [shape = 'u32[]', space=smem, size = 0x4, offset = 0x4, fixed_abs, tag = 'smem constant byte address 0x4 - core index']
  #allocation1 [shape = 'u32[144,128]{1,0:T(1,128)}', space=vmem, size = 0x12000, scoped, tag = 'internal scratch']
  %s0 = inlined_call_operand.vmem [shape: bf16[2,256,32], index: 0, kind: input, shape index: {}]
  %s1 = inlined_call_operand.vmem [shape: bf16[2,32,256], index: 1, kind: input, shape index: {}]
  %s2 = inlined_call_operand.hbm [shape: bf16[2,256,256], index: 2, kind: output, shape index: {}]
  %s3 = sld [smem:[#allocation0]]
  $region41: #{gcn_model_vae_forward.5} parent=0
    _
  %s5 = ssub.s32 1, %s3
  %s6 = scalar_select 0, %s5, %s3
  $region1: #{gcn_model_vae_forward.5} parent=0
    #allocation2 [shape = 'u8[262144]{0}', space=vmem, size = 0x40000, scoped, tag = 'output window, operand 0']
    #allocation3 [shape = 's32[2]{0}', space=sflag, size = 0x8, scoped, tag = 'scoped memory for gcn_model_vae_forward.5']
    %7 = vsyncpa [#allocation3], 0
    %s8 = scalar_lea.sflag [#allocation3], 1
    %9 = vsyncpa %s8, 0
    loop: start=0, step=1, limit=4
    $region2: #{gcn_model_vae_forward.5} parent=1 // loop_pre_header
      _
    $region3: #{gcn_model_vae_forward.5} parent=1 // loop_header
      %s11 = sphi 0, %s15
      %p12 = scmp.ge.s32.totalorder %s11, 4
      %s18 = sphi 0, %s37
      %s19 = sphi 0, %s33
      %s20 = sphi 0, %s29
      %s21 = sphi 0, %s18
      %s22 = sphi 0, %s19
      %s23 = sphi 0, %s20
      %s24 = sphi 0, %s21
      %s25 = sphi 0, %s22
      %s26 = sphi 0, %s23
      %s42 = sphi 0, %s44
      %s45 = sphi 0, %s42
      %s46 = sphi 0, %s45
      %s62 = sphi 0, %s46
      %s70 = sphi 0, %s72
      %s73 = sphi 0, %s70
      %s74 = sphi 0, %s73
      %s90 = sphi 0, %s74
      %s100 = sphi 0, %s102
      %s103 = sphi 0, %s100
      %s104 = sphi 0, %s103
      %s120 = sphi 0, %s104
    $region4: #{gcn_model_vae_forward.5} parent=1 // loop_header_branch
      %14 = sbr.rel (%p12) target = $region8
    $region5: #{gcn_model_vae_forward.5} parent=1 // loop_body
      %s16 = ssub.s32 %s11, 1
      %s17 = ssub.s32 %s11, 2
      %s27 = sadd.s32 1, %s20
      %p28 = scmp.ge.s32.totalorder %s27, 1
      %s29 = scalar_select %p28, 0, %s27
      %s30 = sadd.s32 1, %s19
      %s31 = scalar_select %p28, %s30, %s19
      %p32 = scmp.ge.s32.totalorder %s31, 1
      %s33 = scalar_select %p32, 0, %s31
      %s34 = sadd.s32 1, %s18
      %s35 = scalar_select %p32, %s34, %s18
      %p36 = scmp.ge.s32.totalorder %s35, 2
      %s37 = scalar_select %p36, 0, %s35
      %s38 = ssub.s32 %s18, %s37
      %s39 = ssub.s32 %s19, %s33
      %s40 = sor.u32 %s38, %s39
      %p41 = scmp.eq.s32.totalorder %s40, 0
      %s43 = sadd.s32 %s42, 1
      %s44 = scalar_select %p41, %s42, %s43
      %p47 = pneg %p41
      %p48 = scmp.eq.s32.totalorder %s11, 1
      %p49 = por %p47, %p48
      %p50 = scmp.ne.s32.totalorder %s42, %s45
      %p51 = scmp.eq.s32.totalorder %s11, 0
      %p52 = por %p50, %p51
      %p53 = scmp.ne.s32.totalorder %s42, %s45
      %p54 = scmp.eq.s32.totalorder %s16, 1
      %p55 = por %p53, %p54
      %p56 = scmp.ne.s32.totalorder %s45, %s46
      %p57 = scmp.eq.s32.totalorder %s16, 0
      %p58 = por %p56, %p57
      %p59 = scmp.ne.s32.totalorder %s45, %s46
      %p60 = scmp.eq.s32.totalorder %s17, 1
      %p61 = por %p59, %p60
      %p63 = scmp.ne.s32.totalorder %s46, %s62
      %p64 = scmp.eq.s32.totalorder %s17, 0
      %p65 = por %p63, %p64
      %s66 = ssub.s32 %s18, %s37
      %s67 = ssub.s32 %s20, %s29
      %s68 = sor.u32 %s66, %s67
      %p69 = scmp.eq.s32.totalorder %s68, 0
      %s71 = sadd.s32 %s70, 1
      %s72 = scalar_select %p69, %s70, %s71
      %p75 = pneg %p69
      %p76 = scmp.eq.s32.totalorder %s11, 1
      %p77 = por %p75, %p76
      %p78 = scmp.ne.s32.totalorder %s70, %s73
      %p79 = scmp.eq.s32.totalorder %s11, 0
      %p80 = por %p78, %p79
      %p81 = scmp.ne.s32.totalorder %s70, %s73
      %p82 = scmp.eq.s32.totalorder %s16, 1
      %p83 = por %p81, %p82
      %p84 = scmp.ne.s32.totalorder %s73, %s74
      %p85 = scmp.eq.s32.totalorder %s16, 0
      %p86 = por %p84, %p85
      %p87 = scmp.ne.s32.totalorder %s73, %s74
      %p88 = scmp.eq.s32.totalorder %s17, 1
      %p89 = por %p87, %p88
      %p91 = scmp.ne.s32.totalorder %s74, %s90
      %p92 = scmp.eq.s32.totalorder %s17, 0
      %p93 = por %p91, %p92
      %s94 = ssub.s32 %s18, %s37
      %s95 = ssub.s32 %s19, %s33
      %s96 = sor.u32 %s94, %s95
      %s97 = ssub.s32 %s20, %s29
      %s98 = sor.u32 %s96, %s97
      %p99 = scmp.eq.s32.totalorder %s98, 0
      %s101 = sadd.s32 %s100, 1
      %s102 = scalar_select %p99, %s100, %s101
      %p105 = pneg %p99
      %p106 = scmp.eq.s32.totalorder %s11, 1
      %p107 = por %p105, %p106
      %p108 = scmp.ne.s32.totalorder %s100, %s103
      %p109 = scmp.eq.s32.totalorder %s11, 0
      %p110 = por %p108, %p109
      %p111 = scmp.ne.s32.totalorder %s100, %s103
      %p112 = scmp.eq.s32.totalorder %s16, 1
      %p113 = por %p111, %p112
      %p114 = scmp.ne.s32.totalorder %s103, %s104
      %p115 = scmp.eq.s32.totalorder %s16, 0
      %p116 = por %p114, %p115
      %p117 = scmp.ne.s32.totalorder %s103, %s104
      %p118 = scmp.eq.s32.totalorder %s17, 1
      %p119 = por %p117, %p118
      %p121 = scmp.ne.s32.totalorder %s104, %s120
      %p122 = scmp.eq.s32.totalorder %s17, 0
      %p123 = por %p121, %p122
      %p124 = scmp.le.s32.totalorder 1, %s11
      %p125 = scmp.lt.s32.totalorder %s11, 3
      %p126 = pnand %p124, %p125
      %p127 = pneg %p126
      // Predicated region
      $region9: #{gcn_model_vae_forward.5} parent=5 // pred_check
        _
      $region10: #{gcn_model_vae_forward.5} parent=5 // pred_check_branch
        %129 = sbr.rel (%p126) target = $region12
      $region11: #{gcn_model_vae_forward.5} parent=5 // pred_region
        %s130 = ssub.s32 %s11, 1
      $region12: #{gcn_model_vae_forward.5} parent=5 // pred_fallthru
        _
      %p131 = scmp.lt.s32.totalorder %s11, 2
      // Predicated region
      $region13: #{gcn_model_vae_forward.5} parent=5 // pred_check
        %p132 = pneg %p131
      $region14: #{gcn_model_vae_forward.5} parent=5 // pred_check_branch
        %134 = sbr.rel (%p132) target = $region16
      $region15: #{gcn_model_vae_forward.5} parent=5 // pred_region
        // Predicated region
        $region17: #{gcn_model_vae_forward.5} parent=15 // pred_check
          %p135 = pneg %p52
        $region18: #{gcn_model_vae_forward.5} parent=15 // pred_check_branch
          %137 = sbr.rel (%p135) target = $region20
        $region19: #{gcn_model_vae_forward.5} parent=15 // pred_region
          %s138 = smul.u32 32, %s19
          %p139 = scmp.lt.s32.totalorder %s18, 1
          %s140 = scalar_select %p139, %s18, 1
          %p141 = scmp.lt.s32.totalorder %s138, 31
          %s142 = scalar_select %p141, %s138, 31
          %s143 = smul.addr %s140, 32
          %s144 = sadd.s32 %s142, %s143
          %s145 = smul.addr %s144, 4
          %s146 = scalar_lea.vmem %s0, %s145
          %s147 = smul.u32 32, %s19
        $region20: #{gcn_model_vae_forward.5} parent=15 // pred_fallthru
          _
        // Predicated region
        $region21: #{gcn_model_vae_forward.5} parent=15 // pred_check
          %p148 = pneg %p80
        $region22: #{gcn_model_vae_forward.5} parent=15 // pred_check_branch
          %150 = sbr.rel (%p148) target = $region24
        $region23: #{gcn_model_vae_forward.5} parent=15 // pred_region
          %s151 = smul.u32 2, %s20
          %p152 = scmp.lt.s32.totalorder %s18, 1
          %s153 = scalar_select %p152, %s18, 1
          %p154 = scmp.lt.s32.totalorder %s151, 1
          %s155 = scalar_select %p154, %s151, 1
          %s156 = smul.addr %s153, 8
          %s157 = sadd.s32 %s155, %s156
          %s158 = smul.addr %s157, 4
          %s159 = scalar_lea.vmem %s1, %s158
          %s160 = smul.u32 2, %s20
        $region24: #{gcn_model_vae_forward.5} parent=15 // pred_fallthru
          _
      $region16: #{gcn_model_vae_forward.5} parent=5 // pred_fallthru
        _
      %p161 = scmp.le.s32.totalorder 1, %s11
      %p162 = scmp.lt.s32.totalorder %s11, 3
      %p163 = pnand %p161, %p162
      %p164 = pneg %p163
      // Predicated region
      $region25: #{gcn_model_vae_forward.5} parent=5 // pred_check
        _
      $region26: #{gcn_model_vae_forward.5} parent=5 // pred_check_branch
        %166 = sbr.rel (%p163) target = $region28
      $region27: #{gcn_model_vae_forward.5} parent=5 // pred_region
        %s167 = ssub.s32 %s11, 1
        %s168 = smul.u32 32, %s22
        %p169 = scmp.lt.s32.totalorder %s21, 1
        %s170 = scalar_select %p169, %s21, 1
        %p171 = scmp.lt.s32.totalorder %s168, 31
        %s172 = scalar_select %p171, %s168, 31
        %s173 = smul.addr %s170, 32
        %s174 = sadd.s32 %s172, %s173
        %s175 = smul.addr %s174, 4
        %s176 = scalar_lea.vmem %s0, %s175
        %p177 = pneg %p58
        %p178 = pneg %p55
        %s179 = smul.u32 2, %s23
        %p180 = scmp.lt.s32.totalorder %s21, 1
        %s181 = scalar_select %p180, %s21, 1
        %p182 = scmp.lt.s32.totalorder %s179, 1
        %s183 = scalar_select %p182, %s179, 1
        %s184 = smul.addr %s181, 8
        %s185 = sadd.s32 %s183, %s184
        %s186 = smul.addr %s185, 4
        %s187 = scalar_lea.vmem %s1, %s186
        %p188 = pneg %p86
        %p189 = pneg %p83
        %p190 = pneg %p116
        %p191 = pneg %p113
        %s192 = sand.u32 %s103, 1
        %s193 = scalar_lea.sflag [#allocation3], %s192
        %s194 = sand.u32 %s103, 1
        %s195 = smul.addr %s194, 256
        %s196 = scalar_lea.vmem [#allocation2], %s195
        %s197 = smul.u32 32, %s22
        %p198 = scmp.lt.s32.totalorder %s21, 1
        %s199 = scalar_select %p198, %s21, 1
        %p200 = scmp.lt.s32.totalorder %s197, 31
        %s201 = scalar_select %p200, %s197, 31
        %s202 = smul.addr %s199, 32
        %s203 = sadd.s32 %s201, %s202
        %s204 = smul.addr %s203, 4
        %s205 = scalar_lea.vmem %s0, %s204
        %s206 = smul.u32 32, %s22
        %s207 = smul.u32 2, %s23
        %p208 = scmp.lt.s32.totalorder %s21, 1
        %s209 = scalar_select %p208, %s21, 1
        %p210 = scmp.lt.s32.totalorder %s207, 1
        %s211 = scalar_select %p210, %s207, 1
        %s212 = smul.addr %s209, 8
        %s213 = sadd.s32 %s211, %s212
        %s214 = smul.addr %s213, 4
        %s215 = scalar_lea.vmem %s1, %s214
        %s216 = smul.u32 2, %s23
        %s217 = smul.u32 32, %s22
        %s218 = smul.u32 2, %s23
        %v220 = vld [vmem:[%s205] sm:$0xf]
        %v221 = vld [vmem:[%s205 + $0x4] sm:$0xf]
        %v222 = vld [vmem:[%s205 + $0x8] sm:$0xf]
        %v223 = vld [vmem:[%s205 + $0xc] sm:$0xf]
        %v224 = vld [vmem:[%s205 + $0x10] sm:$0xf]
        %v225 = vld [vmem:[%s205 + $0x14] sm:$0xf]
        %v226 = vld [vmem:[%s205 + $0x18] sm:$0xf]
        %v227 = vld [vmem:[%s205 + $0x1c] sm:$0xf]
        %v228 = vld [vmem:[%s205 + $0x20] sm:$0xf]
        %v229 = vld [vmem:[%s205 + $0x24] sm:$0xf]
        %v230 = vld [vmem:[%s205 + $0x28] sm:$0xf]
        %v231 = vld [vmem:[%s205 + $0x2c] sm:$0xf]
        %v232 = vld [vmem:[%s205 + $0x30] sm:$0xf]
        %v233 = vld [vmem:[%s205 + $0x34] sm:$0xf]
        %v234 = vld [vmem:[%s205 + $0x38] sm:$0xf]
        %v235 = vld [vmem:[%s205 + $0x3c] sm:$0xf]
        %v236 = vld [vmem:[%s205 + $0x40] sm:$0xf]
        %v237 = vld [vmem:[%s205 + $0x44] sm:$0xf]
        %v238 = vld [vmem:[%s205 + $0x48] sm:$0xf]
        %v239 = vld [vmem:[%s205 + $0x4c] sm:$0xf]
        %v240 = vld [vmem:[%s205 + $0x50] sm:$0xf]
        %v241 = vld [vmem:[%s205 + $0x54] sm:$0xf]
        %v242 = vld [vmem:[%s205 + $0x58] sm:$0xf]
        %v243 = vld [vmem:[%s205 + $0x5c] sm:$0xf]
        %v244 = vld [vmem:[%s205 + $0x60] sm:$0xf]
        %v245 = vld [vmem:[%s205 + $0x64] sm:$0xf]
        %v246 = vld [vmem:[%s205 + $0x68] sm:$0xf]
        %v247 = vld [vmem:[%s205 + $0x6c] sm:$0xf]
        %v248 = vld [vmem:[%s205 + $0x70] sm:$0xf]
        %v249 = vld [vmem:[%s205 + $0x74] sm:$0xf]
        %v250 = vld [vmem:[%s205 + $0x78] sm:$0xf]
        %v251 = vld [vmem:[%s205 + $0x7c] sm:$0xf]
        %v252 = vld [vmem:[%s215] sm:$0xff]
        %v253 = vld [vmem:[%s215 + $0x8] sm:$0xff]
        %v254 = vld [vmem:[%s215 + $0x10] sm:$0xff]
        %v255 = vld [vmem:[%s215 + $0x18] sm:$0xff]
        %v288 = vunpack.c.l.b16 %v220
        %v289 = vunpack.c.l.b16 %v221
        %v290 = vunpack.c.l.b16 %v222
        %v291 = vunpack.c.l.b16 %v223
        %v292 = vunpack.c.l.b16 %v224
        %v293 = vunpack.c.l.b16 %v225
        %v294 = vunpack.c.l.b16 %v226
        %v295 = vunpack.c.l.b16 %v227
        %v296 = vunpack.c.l.b16 %v228
        %v297 = vunpack.c.l.b16 %v229
        %v298 = vunpack.c.l.b16 %v230
        %v299 = vunpack.c.l.b16 %v231
        %v300 = vunpack.c.l.b16 %v232
        %v301 = vunpack.c.l.b16 %v233
        %v302 = vunpack.c.l.b16 %v234
        %v303 = vunpack.c.l.b16 %v235
        %v304 = vunpack.c.l.b16 %v236
        %v305 = vunpack.c.l.b16 %v237
        %v306 = vunpack.c.l.b16 %v238
        %v307 = vunpack.c.l.b16 %v239
        %v308 = vunpack.c.l.b16 %v240
        %v309 = vunpack.c.l.b16 %v241
        %v310 = vunpack.c.l.b16 %v242
        %v311 = vunpack.c.l.b16 %v243
        %v312 = vunpack.c.l.b16 %v244
        %v313 = vunpack.c.l.b16 %v245
        %v314 = vunpack.c.l.b16 %v246
        %v315 = vunpack.c.l.b16 %v247
        %v316 = vunpack.c.l.b16 %v248
        %v317 = vunpack.c.l.b16 %v249
        %v318 = vunpack.c.l.b16 %v250
        %v319 = vunpack.c.l.b16 %v251
        %v320 = vpack.c.b16 %v289, %v288
        %v321 = vpack.c.b16 %v291, %v290
        %v322 = vpack.c.b16 %v293, %v292
        %v323 = vpack.c.b16 %v295, %v294
        %v324 = vpack.c.b16 %v297, %v296
        %v325 = vpack.c.b16 %v299, %v298
        %v326 = vpack.c.b16 %v301, %v300
        %v327 = vpack.c.b16 %v303, %v302
        %v328 = vpack.c.b16 %v305, %v304
        %v329 = vpack.c.b16 %v307, %v306
        %v330 = vpack.c.b16 %v309, %v308
        %v331 = vpack.c.b16 %v311, %v310
        %v332 = vpack.c.b16 %v313, %v312
        %v333 = vpack.c.b16 %v315, %v314
        %v334 = vpack.c.b16 %v317, %v316
        %v335 = vpack.c.b16 %v319, %v318
        %v340 = vunpack.c.l.b16 %v252
        %v341 = vunpack.c.h.b16 %v252
        %v342 = vunpack.c.l.b16 %v253
        %v343 = vunpack.c.h.b16 %v253
        %v344 = vunpack.c.l.b16 %v254
        %v345 = vunpack.c.h.b16 %v254
        %v346 = vunpack.c.l.b16 %v255
        %v347 = vunpack.c.h.b16 %v255
        %v348 = vpack.c.b16 %v342, %v340
        %v349 = vpack.c.b16 %v343, %v341
        %v350 = vpack.c.b16 %v346, %v344
        %v351 = vpack.c.b16 %v347, %v345
        %vm356 = vcmask 261120
        %v358 = vsel %vm356, %v320, 0
        %v361 = vsel %vm356, %v321, 0
        %v364 = vsel %vm356, %v322, 0
        %v367 = vsel %vm356, %v323, 0
        %v370 = vsel %vm356, %v324, 0
        %v373 = vsel %vm356, %v325, 0
        %v376 = vsel %vm356, %v326, 0
        %v379 = vsel %vm356, %v327, 0
        %v382 = vsel %vm356, %v328, 0
        %v385 = vsel %vm356, %v329, 0
        %v388 = vsel %vm356, %v330, 0
        %v391 = vsel %vm356, %v331, 0
        %v394 = vsel %vm356, %v332, 0
        %v397 = vsel %vm356, %v333, 0
        %v400 = vsel %vm356, %v334, 0
        %v403 = vsel %vm356, %v335, 0
        %405 = vmatprep.subr.bf16.mxu0 %v349
        %406 = vmatpush1.bf16.msra.mxu0 %v348
        %407 = vmatprep.subr.bf16.mxu0 %v351
        %408 = vmatpush1.bf16.msra.mxu0 %v350
        %409 = vmatprep.subr.bf16.mxu0 0
        %410 = vmatpush1.bf16.msra.mxu0 0
        %411 = vmatprep.subr.bf16.mxu0 0
        %412 = vmatpush1.bf16.msra.mxu0 0
        %413 = vmatprep.subr.bf16.mxu0 0
        %414 = vmatpush1.bf16.msra.mxu0 0
        %415 = vmatprep.subr.bf16.mxu0 0
        %416 = vmatpush1.bf16.msra.mxu0 0
        %417 = vmatprep.subr.bf16.mxu0 0
        %418 = vmatpush1.bf16.msra.mxu0 0
        %419 = vmatprep.subr.bf16.mxu0 0
        %420 = vmatpush1.bf16.msra.mxu0 0
        %421 = vmatprep.subr.bf16.mxu0 0
        %422 = vmatpush1.bf16.msra.mxu0 0
        %423 = vmatprep.subr.bf16.mxu0 0
        %424 = vmatpush1.bf16.msra.mxu0 0
        %425 = vmatprep.subr.bf16.mxu0 0
        %426 = vmatpush1.bf16.msra.mxu0 0
        %427 = vmatprep.subr.bf16.mxu0 0
        %428 = vmatpush1.bf16.msra.mxu0 0
        %429 = vmatprep.subr.bf16.mxu0 0
        %430 = vmatpush1.bf16.msra.mxu0 0
        %431 = vmatprep.subr.bf16.mxu0 0
        %432 = vmatpush1.bf16.msra.mxu0 0
        %433 = vmatprep.subr.bf16.mxu0 0
        %434 = vmatpush1.bf16.msra.mxu0 0
        %435 = vmatprep.subr.bf16.mxu0 0
        %436 = vmatpush1.bf16.msra.mxu0 0
        %437 = vmatprep.mubr.bf16.mxu0 0
        %438 = vmatmul.mubr.bf16.gmra.mrb[0].mxu0 %v358
        %v439 = vpop.f32.mrb[0].mxu0
        %v440 = vadd.f32 0.0, %v439
        %v441 = vpop.f32.mrb[0].mxu0
        %v442 = vadd.f32 0.0, %v441
        %v443 = vpop.f32.mrb[0].mxu0
        %v444 = vadd.f32 0.0, %v443
        %v445 = vpop.f32.mrb[0].mxu0
        %v446 = vadd.f32 0.0, %v445
        %447 = vmatprep.mubr.bf16.mxu0 0
        %448 = vmatmul.mubr.bf16.gmra.mrb[0].mxu0 %v361
        %v449 = vpop.f32.mrb[0].mxu0
        %v450 = vadd.f32 0.0, %v449
        %v451 = vpop.f32.mrb[0].mxu0
        %v452 = vadd.f32 0.0, %v451
        %v453 = vpop.f32.mrb[0].mxu0
        %v454 = vadd.f32 0.0, %v453
        %v455 = vpop.f32.mrb[0].mxu0
        %v456 = vadd.f32 0.0, %v455
        %457 = vmatprep.mubr.bf16.mxu0 0
        %458 = vmatmul.mubr.bf16.gmra.mrb[0].mxu0 %v364
        %v459 = vpop.f32.mrb[0].mxu0
        %v460 = vadd.f32 0.0, %v459
        %v461 = vpop.f32.mrb[0].mxu0
        %v462 = vadd.f32 0.0, %v461
        %v463 = vpop.f32.mrb[0].mxu0
        %v464 = vadd.f32 0.0, %v463
        %v465 = vpop.f32.mrb[0].mxu0
        %v466 = vadd.f32 0.0, %v465
        %467 = vmatprep.mubr.bf16.mxu0 0
        %468 = vmatmul.mubr.bf16.gmra.mrb[0].mxu0 %v367
        %v469 = vpop.f32.mrb[0].mxu0
        %v470 = vadd.f32 0.0, %v469
        %v471 = vpop.f32.mrb[0].mxu0
        %v472 = vadd.f32 0.0, %v471
        %v473 = vpop.f32.mrb[0].mxu0
        %v474 = vadd.f32 0.0, %v473
        %v475 = vpop.f32.mrb[0].mxu0
        %v476 = vadd.f32 0.0, %v475
        %477 = vmatprep.mubr.bf16.mxu0 0
        %478 = vmatmul.mubr.bf16.gmra.mrb[0].mxu0 %v370
        %v479 = vpop.f32.mrb[0].mxu0
        %v480 = vadd.f32 0.0, %v479
        %v481 = vpop.f32.mrb[0].mxu0
        %v482 = vadd.f32 0.0, %v481
        %v483 = vpop.f32.mrb[0].mxu0
        %v484 = vadd.f32 0.0, %v483
        %v485 = vpop.f32.mrb[0].mxu0
        %v486 = vadd.f32 0.0, %v485
        %487 = vmatprep.mubr.bf16.mxu0 0
        %488 = vmatmul.mubr.bf16.gmra.mrb[0].mxu0 %v373
        %v489 = vpop.f32.mrb[0].mxu0
        %v490 = vadd.f32 0.0, %v489
        %v491 = vpop.f32.mrb[0].mxu0
        %v492 = vadd.f32 0.0, %v491
        %v493 = vpop.f32.mrb[0].mxu0
        %v494 = vadd.f32 0.0, %v493
        %v495 = vpop.f32.mrb[0].mxu0
        %v496 = vadd.f32 0.0, %v495
        %497 = vmatprep.mubr.bf16.mxu0 0
        %498 = vmatmul.mubr.bf16.gmra.mrb[0].mxu0 %v376
        %v499 = vpop.f32.mrb[0].mxu0
        %v500 = vadd.f32 0.0, %v499
        %v501 = vpop.f32.mrb[0].mxu0
        %v502 = vadd.f32 0.0, %v501
        %v503 = vpop.f32.mrb[0].mxu0
        %v504 = vadd.f32 0.0, %v503
        %v505 = vpop.f32.mrb[0].mxu0
        %v506 = vadd.f32 0.0, %v505
        %507 = vmatprep.mubr.bf16.mxu0 0
        %508 = vmatmul.mubr.bf16.gmra.mrb[0].mxu0 %v379
        %v509 = vpop.f32.mrb[0].mxu0
        %v510 = vadd.f32 0.0, %v509
        %v511 = vpop.f32.mrb[0].mxu0
        %v512 = vadd.f32 0.0, %v511
        %v513 = vpop.f32.mrb[0].mxu0
        %v514 = vadd.f32 0.0, %v513
        %v515 = vpop.f32.mrb[0].mxu0
        %v516 = vadd.f32 0.0, %v515
        %517 = vmatprep.mubr.bf16.mxu0 0
        %518 = vmatmul.mubr.bf16.gmra.mrb[0].mxu0 %v382
        %v519 = vpop.f32.mrb[0].mxu0
        %v520 = vadd.f32 0.0, %v519
        %v521 = vpop.f32.mrb[0].mxu0
        %v522 = vadd.f32 0.0, %v521
        %v523 = vpop.f32.mrb[0].mxu0
        %v524 = vadd.f32 0.0, %v523
        %v525 = vpop.f32.mrb[0].mxu0
        %v526 = vadd.f32 0.0, %v525
        %527 = vmatprep.mubr.bf16.mxu0 0
        %528 = vmatmul.mubr.bf16.gmra.mrb[0].mxu0 %v385
        %v529 = vpop.f32.mrb[0].mxu0
        %v530 = vadd.f32 0.0, %v529
        %v531 = vpop.f32.mrb[0].mxu0
        %v532 = vadd.f32 0.0, %v531
        %v533 = vpop.f32.mrb[0].mxu0
        %v534 = vadd.f32 0.0, %v533
        %v535 = vpop.f32.mrb[0].mxu0
        %v536 = vadd.f32 0.0, %v535
        %537 = vmatprep.mubr.bf16.mxu0 0
        %538 = vmatmul.mubr.bf16.gmra.mrb[0].mxu0 %v388
        %v539 = vpop.f32.mrb[0].mxu0
        %v540 = vadd.f32 0.0, %v539
        %v541 = vpop.f32.mrb[0].mxu0
        %v542 = vadd.f32 0.0, %v541
        %v543 = vpop.f32.mrb[0].mxu0
        %v544 = vadd.f32 0.0, %v543
        %v545 = vpop.f32.mrb[0].mxu0
        %v546 = vadd.f32 0.0, %v545
        %547 = vmatprep.mubr.bf16.mxu0 0
        %548 = vmatmul.mubr.bf16.gmra.mrb[0].mxu0 %v391
        %v549 = vpop.f32.mrb[0].mxu0
        %v550 = vadd.f32 0.0, %v549
        %v551 = vpop.f32.mrb[0].mxu0
        %v552 = vadd.f32 0.0, %v551
        %v553 = vpop.f32.mrb[0].mxu0
        %v554 = vadd.f32 0.0, %v553
        %v555 = vpop.f32.mrb[0].mxu0
        %v556 = vadd.f32 0.0, %v555
        %557 = vmatprep.mubr.bf16.mxu0 0
        %558 = vmatmul.mubr.bf16.gmra.mrb[0].mxu0 %v394
        %v559 = vpop.f32.mrb[0].mxu0
        %v560 = vadd.f32 0.0, %v559
        %v561 = vpop.f32.mrb[0].mxu0
        %v562 = vadd.f32 0.0, %v561
        %v563 = vpop.f32.mrb[0].mxu0
        %v564 = vadd.f32 0.0, %v563
        %v565 = vpop.f32.mrb[0].mxu0
        %v566 = vadd.f32 0.0, %v565
        %567 = vmatprep.mubr.bf16.mxu0 0
        %568 = vmatmul.mubr.bf16.gmra.mrb[0].mxu0 %v397
        %v569 = vpop.f32.mrb[0].mxu0
        %v570 = vadd.f32 0.0, %v569
        %v571 = vpop.f32.mrb[0].mxu0
        %v572 = vadd.f32 0.0, %v571
        %v573 = vpop.f32.mrb[0].mxu0
        %v574 = vadd.f32 0.0, %v573
        %v575 = vpop.f32.mrb[0].mxu0
        %v576 = vadd.f32 0.0, %v575
        %577 = vmatprep.mubr.bf16.mxu0 0
        %578 = vmatmul.mubr.bf16.gmra.mrb[0].mxu0 %v400
        %v579 = vpop.f32.mrb[0].mxu0
        %v580 = vadd.f32 0.0, %v579
        %v581 = vpop.f32.mrb[0].mxu0
        %v582 = vadd.f32 0.0, %v581
        %v583 = vpop.f32.mrb[0].mxu0
        %v584 = vadd.f32 0.0, %v583
        %v585 = vpop.f32.mrb[0].mxu0
        %v586 = vadd.f32 0.0, %v585
        %587 = vmatprep.mubr.bf16.mxu0 0
        %588 = vmatmul.mubr.bf16.gmra.mrb[0].mxu0 %v403
        %v589 = vpop.f32.mrb[0].mxu0
        %v590 = vadd.f32 0.0, %v589
        %v591 = vpop.f32.mrb[0].mxu0
        %v592 = vadd.f32 0.0, %v591
        %v593 = vpop.f32.mrb[0].mxu0
        %v594 = vadd.f32 0.0, %v593
        %v595 = vpop.f32.mrb[0].mxu0
        %v596 = vadd.f32 0.0, %v595
        %597 = vdwg.mxu0
        %v598 = vpack.c.bf16 %v444, %v440
        %v599 = vpack.c.bf16 %v446, %v442
        %v600 = vpack.c.bf16 %v454, %v450
        %v601 = vpack.c.bf16 %v456, %v452
        %v602 = vpack.c.bf16 %v464, %v460
        %v603 = vpack.c.bf16 %v466, %v462
        %v604 = vpack.c.bf16 %v474, %v470
        %v605 = vpack.c.bf16 %v476, %v472
        %v606 = vpack.c.bf16 %v484, %v480
        %v607 = vpack.c.bf16 %v486, %v482
        %v608 = vpack.c.bf16 %v494, %v490
        %v609 = vpack.c.bf16 %v496, %v492
        %v610 = vpack.c.bf16 %v504, %v500
        %v611 = vpack.c.bf16 %v506, %v502
        %v612 = vpack.c.bf16 %v514, %v510
        %v613 = vpack.c.bf16 %v516, %v512
        %v614 = vpack.c.bf16 %v524, %v520
        %v615 = vpack.c.bf16 %v526, %v522
        %v616 = vpack.c.bf16 %v534, %v530
        %v617 = vpack.c.bf16 %v536, %v532
        %v618 = vpack.c.bf16 %v544, %v540
        %v619 = vpack.c.bf16 %v546, %v542
        %v620 = vpack.c.bf16 %v554, %v550
        %v621 = vpack.c.bf16 %v556, %v552
        %v622 = vpack.c.bf16 %v564, %v560
        %v623 = vpack.c.bf16 %v566, %v562
        %v624 = vpack.c.bf16 %v574, %v570
        %v625 = vpack.c.bf16 %v576, %v572
        %v626 = vpack.c.bf16 %v584, %v580
        %v627 = vpack.c.bf16 %v586, %v582
        %v628 = vpack.c.bf16 %v594, %v590
        %v629 = vpack.c.bf16 %v596, %v592
        %v662 = vunpack.c.l.b16 %v598
        %v663 = vunpack.c.l.b16 %v599
        %v664 = vunpack.c.h.b16 %v598
        %v665 = vunpack.c.h.b16 %v599
        %v666 = vunpack.c.l.b16 %v600
        %v667 = vunpack.c.l.b16 %v601
        %v668 = vunpack.c.h.b16 %v600
        %v669 = vunpack.c.h.b16 %v601
        %v670 = vunpack.c.l.b16 %v602
        %v671 = vunpack.c.l.b16 %v603
        %v672 = vunpack.c.h.b16 %v602
        %v673 = vunpack.c.h.b16 %v603
        %v674 = vunpack.c.l.b16 %v604
        %v675 = vunpack.c.l.b16 %v605
        %v676 = vunpack.c.h.b16 %v604
        %v677 = vunpack.c.h.b16 %v605
        %v678 = vunpack.c.l.b16 %v606
        %v679 = vunpack.c.l.b16 %v607
        %v680 = vunpack.c.h.b16 %v606
        %v681 = vunpack.c.h.b16 %v607
        %v682 = vunpack.c.l.b16 %v608
        %v683 = vunpack.c.l.b16 %v609
        %v684 = vunpack.c.h.b16 %v608
        %v685 = vunpack.c.h.b16 %v609
        %v686 = vunpack.c.l.b16 %v610
        %v687 = vunpack.c.l.b16 %v611
        %v688 = vunpack.c.h.b16 %v610
        %v689 = vunpack.c.h.b16 %v611
        %v690 = vunpack.c.l.b16 %v612
        %v691 = vunpack.c.l.b16 %v613
        %v692 = vunpack.c.h.b16 %v612
        %v693 = vunpack.c.h.b16 %v613
        %v694 = vunpack.c.l.b16 %v614
        %v695 = vunpack.c.l.b16 %v615
        %v696 = vunpack.c.h.b16 %v614
        %v697 = vunpack.c.h.b16 %v615
        %v698 = vunpack.c.l.b16 %v616
        %v699 = vunpack.c.l.b16 %v617
        %v700 = vunpack.c.h.b16 %v616
        %v701 = vunpack.c.h.b16 %v617
        %v702 = vunpack.c.l.b16 %v618
        %v703 = vunpack.c.l.b16 %v619
        %v704 = vunpack.c.h.b16 %v618
        %v705 = vunpack.c.h.b16 %v619
        %v706 = vunpack.c.l.b16 %v620
        %v707 = vunpack.c.l.b16 %v621
        %v708 = vunpack.c.h.b16 %v620
        %v709 = vunpack.c.h.b16 %v621
        %v710 = vunpack.c.l.b16 %v622
        %v711 = vunpack.c.l.b16 %v623
        %v712 = vunpack.c.h.b16 %v622
        %v713 = vunpack.c.h.b16 %v623
        %v714 = vunpack.c.l.b16 %v624
        %v715 = vunpack.c.l.b16 %v625
        %v716 = vunpack.c.h.b16 %v624
        %v717 = vunpack.c.h.b16 %v625
        %v718 = vunpack.c.l.b16 %v626
        %v719 = vunpack.c.l.b16 %v627
        %v720 = vunpack.c.h.b16 %v626
        %v721 = vunpack.c.h.b16 %v627
        %v722 = vunpack.c.l.b16 %v628
        %v723 = vunpack.c.l.b16 %v629
        %v724 = vunpack.c.h.b16 %v628
        %v725 = vunpack.c.h.b16 %v629
        %v726 = vpack.c.b16 %v663, %v662
        %v727 = vpack.c.b16 %v665, %v664
        %v728 = vpack.c.b16 %v667, %v666
        %v729 = vpack.c.b16 %v669, %v668
        %v730 = vpack.c.b16 %v671, %v670
        %v731 = vpack.c.b16 %v673, %v672
        %v732 = vpack.c.b16 %v675, %v674
        %v733 = vpack.c.b16 %v677, %v676
        %v734 = vpack.c.b16 %v679, %v678
        %v735 = vpack.c.b16 %v681, %v680
        %v736 = vpack.c.b16 %v683, %v682
        %v737 = vpack.c.b16 %v685, %v684
        %v738 = vpack.c.b16 %v687, %v686
        %v739 = vpack.c.b16 %v689, %v688
        %v740 = vpack.c.b16 %v691, %v690
        %v741 = vpack.c.b16 %v693, %v692
        %v742 = vpack.c.b16 %v695, %v694
        %v743 = vpack.c.b16 %v697, %v696
        %v744 = vpack.c.b16 %v699, %v698
        %v745 = vpack.c.b16 %v701, %v700
        %v746 = vpack.c.b16 %v703, %v702
        %v747 = vpack.c.b16 %v705, %v704
        %v748 = vpack.c.b16 %v707, %v706
        %v749 = vpack.c.b16 %v709, %v708
        %v750 = vpack.c.b16 %v711, %v710
        %v751 = vpack.c.b16 %v713, %v712
        %v752 = vpack.c.b16 %v715, %v714
        %v753 = vpack.c.b16 %v717, %v716
        %v754 = vpack.c.b16 %v719, %v718
        %v755 = vpack.c.b16 %v721, %v720
        %v756 = vpack.c.b16 %v723, %v722
        %v757 = vpack.c.b16 %v725, %v724
        %790 = vst [vmem:[%s196] sm:$0xff] %v726
        %791 = vst [vmem:[%s196 + $0x8] sm:$0xff] %v727
        %792 = vst [vmem:[%s196 + $0x10] sm:$0xff] %v728
        %793 = vst [vmem:[%s196 + $0x18] sm:$0xff] %v729
        %794 = vst [vmem:[%s196 + $0x20] sm:$0xff] %v730
        %795 = vst [vmem:[%s196 + $0x28] sm:$0xff] %v731
        %796 = vst [vmem:[%s196 + $0x30] sm:$0xff] %v732
        %797 = vst [vmem:[%s196 + $0x38] sm:$0xff] %v733
        %798 = vst [vmem:[%s196 + $0x40] sm:$0xff] %v734
        %799 = vst [vmem:[%s196 + $0x48] sm:$0xff] %v735
        %800 = vst [vmem:[%s196 + $0x50] sm:$0xff] %v736
        %801 = vst [vmem:[%s196 + $0x58] sm:$0xff] %v737
        %802 = vst [vmem:[%s196 + $0x60] sm:$0xff] %v738
        %803 = vst [vmem:[%s196 + $0x68] sm:$0xff] %v739
        %804 = vst [vmem:[%s196 + $0x70] sm:$0xff] %v740
        %805 = vst [vmem:[%s196 + $0x78] sm:$0xff] %v741
        %806 = vst [vmem:[%s196 + $0x80] sm:$0xff] %v742
        %807 = vst [vmem:[%s196 + $0x88] sm:$0xff] %v743
        %808 = vst [vmem:[%s196 + $0x90] sm:$0xff] %v744
        %809 = vst [vmem:[%s196 + $0x98] sm:$0xff] %v745
        %810 = vst [vmem:[%s196 + $0xa0] sm:$0xff] %v746
        %811 = vst [vmem:[%s196 + $0xa8] sm:$0xff] %v747
        %812 = vst [vmem:[%s196 + $0xb0] sm:$0xff] %v748
        %813 = vst [vmem:[%s196 + $0xb8] sm:$0xff] %v749
        %814 = vst [vmem:[%s196 + $0xc0] sm:$0xff] %v750
        %815 = vst [vmem:[%s196 + $0xc8] sm:$0xff] %v751
        %816 = vst [vmem:[%s196 + $0xd0] sm:$0xff] %v752
        %817 = vst [vmem:[%s196 + $0xd8] sm:$0xff] %v753
        %818 = vst [vmem:[%s196 + $0xe0] sm:$0xff] %v754
        %819 = vst [vmem:[%s196 + $0xe8] sm:$0xff] %v755
        %820 = vst [vmem:[%s196 + $0xf0] sm:$0xff] %v756
        %821 = vst [vmem:[%s196 + $0xf8] sm:$0xff] %v757
        %s822 = sand.u32 %s103, 1
        %s823 = scalar_lea.sflag [#allocation3], %s822
        %s824 = sand.u32 %s103, 1
        %s825 = smul.addr %s824, 256
        %s826 = scalar_lea.vmem [#allocation2], %s825
        // Predicated region
        $region29: #{gcn_model_vae_forward.5} parent=27 // pred_check
          %p827 = pneg %p113
        $region30: #{gcn_model_vae_forward.5} parent=27 // pred_check_branch
          %829 = sbr.rel (%p827) target = $region32
        $region31: #{gcn_model_vae_forward.5} parent=27 // pred_region
          %s830 = smul.u32 32, %s22
          %s831 = smul.u32 2, %s23
          %s833 = ssub.s32 4096, 4096
          %834 = vsyncadd %s823, %s833
          %s835 = smul.addr %s830, 2
          %s836 = sadd.s32 %s831, %s835
          %s837 = smul.addr %s21, 64
          %s838 = sadd.s32 %s836, %s837
          %s839 = smul.addr %s838, 64
          %s840 = scalar_lea.hbm %s2, %s839
          %s841 = sshll.u32 %s826, 4
          %s842 = int_to_ptr.vmem [resolvable:$true] %s841
          %847 = dma.vmem_to_hbm [thread:$0]  %s842, 4096, %s840, %s823, 128, 128, 8
        $region32: #{gcn_model_vae_forward.5} parent=27 // pred_fallthru
          _
      $region28: #{gcn_model_vae_forward.5} parent=5 // pred_fallthru
        _
      %p848 = scmp.le.s32.totalorder 2, %s11
      // Predicated region
      $region33: #{gcn_model_vae_forward.5} parent=5 // pred_check
        %p849 = pneg %p848
      $region34: #{gcn_model_vae_forward.5} parent=5 // pred_check_branch
        %851 = sbr.rel (%p849) target = $region36
      $region35: #{gcn_model_vae_forward.5} parent=5 // pred_region
        %s852 = ssub.s32 %s11, 2
        // Predicated region
        $region37: #{gcn_model_vae_forward.5} parent=35 // pred_check
          %p853 = pneg %p119
        $region38: #{gcn_model_vae_forward.5} parent=35 // pred_check_branch
          %855 = sbr.rel (%p853) target = $region40
        $region39: #{gcn_model_vae_forward.5} parent=35 // pred_region
          %s856 = sand.u32 %s104, 1
          %s857 = scalar_lea.sflag [#allocation3], %s856
          %s858 = sand.u32 %s104, 1
          %s859 = smul.addr %s858, 256
          %s860 = scalar_lea.vmem [#allocation2], %s859
          %861 = dma.done %s857, 4096
        $region40: #{gcn_model_vae_forward.5} parent=35 // pred_fallthru
          _
      $region36: #{gcn_model_vae_forward.5} parent=5 // pred_fallthru
        _
    $region6: #{gcn_model_vae_forward.5} parent=1 // loop_footer
      %s15 = sadd.s32 1, %s11
    $region7: #{gcn_model_vae_forward.5} parent=1 // loop_footer_branch
      %10 = sbr.rel target = $region3
    $region8: #{gcn_model_vae_forward.5} parent=1 // loop_exit
      _
    %862 = vsyncpa [#allocation3], 1
    %s863 = scalar_lea.sflag [#allocation3], 1
    %864 = vsyncpa %s863, 1

</llo_original>
